<compile_context>
chip_gen: v5e
topology: v5e:2x2
jax: 0.10.0
libtpu: 0.0.40
codegen_flags: <defaults>
</compile_context>

<pallas_src>
import jax
import jax.numpy as jnp
from jax.experimental import pallas as pl
from jax.experimental.pallas import tpu as pltpu

B, S, H, F, V = 2, 8, 32, 64, 64     # batch, seq, real hidden, real ffn, vocab
HP, FP = 128, 128                    # lane-padded hidden / ffn widths (zero-padded weights)
NSEQ = 2 * B                         # left + right sequences processed together
TOK = NSEQ * S                       # total tokens per forward

_VMEM = pl.BlockSpec(memory_space=pltpu.MemorySpace.VMEM)


# ----------------------------- fused Pallas kernel -----------------------------

def make_fused_kernel(use_cos: bool, with_labels: bool):
    def kernel(*refs):
        if with_labels:
            (ids_ref, mask_ref, labels_ref, tok_ref, pos_ref, lneg_ref, lneb_ref,
             wq_ref, wk_ref, wv_ref, wo_ref, ln1g_ref, ln1b_ref,
             w1_ref, w2_ref, ln2g_ref, ln2b_ref, out_ref) = refs
        else:
            (ids_ref, mask_ref, tok_ref, pos_ref, lneg_ref, lneb_ref,
             wq_ref, wk_ref, wv_ref, wo_ref, ln1g_ref, ln1b_ref,
             w1_ref, w2_ref, ln2g_ref, ln2b_ref, out_ref) = refs
            labels_ref = None

        # ---- embedding lookup inside the kernel (one-hot matmul gather, MXU) ----
        ids = ids_ref[...]                                              # (TOK, 1) int32
        vocab_iota = jax.lax.broadcasted_iota(jnp.int32, (TOK, V), 1)
        onehot = (ids == vocab_iota).astype(jnp.float32)                # (TOK, V)
        x = jnp.dot(onehot, tok_ref[...],
                    preferred_element_type=jnp.float32)                 # (TOK, HP)
        x = x.reshape(NSEQ, S, HP) + pos_ref[...][None, :, :]           # learned positions

        def ln(v, g, b):
            # normalize over the REAL H dims only; padded lanes are zero, gamma/beta padded
            # with zero keep them zero after the affine.
            mu = jnp.sum(v, axis=-1, keepdims=True) * (1.0 / H)
            ex2 = jnp.sum(v * v, axis=-1, keepdims=True) * (1.0 / H)
            var = jnp.maximum(ex2 - mu * mu, 0.0)
            return (v - mu) * jax.lax.rsqrt(var + 1e-12) * g + b

        x = ln(x, lneg_ref[...], lneb_ref[...])                          # embedding LayerNorm

        # ---- single-head self-attention over all 2B sequences at once ----
        xt = x.reshape(TOK, HP)                                          # token-major matmuls
        q = jnp.dot(xt, wq_ref[...], preferred_element_type=jnp.float32).reshape(NSEQ, S, HP)
        k = jnp.dot(xt, wk_ref[...], preferred_element_type=jnp.float32).reshape(NSEQ, S, HP)
        v = jnp.dot(xt, wv_ref[...], preferred_element_type=jnp.float32).reshape(NSEQ, S, HP)

        scores = jnp.einsum('bqd,bkd->bqk', q, k,
                            preferred_element_type=jnp.float32) * (1.0 / (H ** 0.5))
        scores = scores + (mask_ref[...] - 1.0) * 1e9                    # additive key mask
        scores = scores - jnp.max(scores, axis=-1, keepdims=True)
        p = jnp.exp(scores)
        p = p * pl.reciprocal(jnp.sum(p, axis=-1, keepdims=True), approx=True)  # EUP
        attn = jnp.einsum('bqk,bkd->bqd', p, v, preferred_element_type=jnp.float32)

        x = ln(x + jnp.dot(attn.reshape(TOK, HP), wo_ref[...],
                           preferred_element_type=jnp.float32).reshape(NSEQ, S, HP),
               ln1g_ref[...], ln1b_ref[...])

        # ---- FFN ----
        h = jax.nn.gelu(jnp.dot(x.reshape(TOK, HP), w1_ref[...],
                                preferred_element_type=jnp.float32))     # (TOK, FP)
        x = ln(x + jnp.dot(h, w2_ref[...],
                           preferred_element_type=jnp.float32).reshape(NSEQ, S, HP),
               ln2g_ref[...], ln2b_ref[...])

        # TagModel._get_agg(agg='mean'): plain mean over the sequence axis.
        pooled = jnp.mean(x, axis=1)                                     # (NSEQ, HP)

        # ---- combine (batch_dot or CosineSimilarity(dim=1, eps=1e-8)) ----
        l_emb = pooled[:B]                                               # (B, HP)
        r_emb = pooled[B:]                                               # (B, HP)
        num = jnp.sum(l_emb * r_emb, axis=1, keepdims=True)              # (B, 1) batch_dot
        if use_cos:
            lnrm = jnp.sqrt(jnp.sum(l_emb * l_emb, axis=1, keepdims=True))
            rnrm = jnp.sqrt(jnp.sum(r_emb * r_emb, axis=1, keepdims=True))
            preds = num / jnp.maximum(lnrm * rnrm, 1e-8)
        else:
            preds = num

        # ---- BCE on probs = hstack([1 - preds, preds]) (mean reduction) ----
        if with_labels:
            y = labels_ref[...]                                          # (B, 2)

            def bce_term(prob, tgt):
                lp = jnp.maximum(jnp.log(prob), -100.0)                  # torch BCELoss clamp
                lq = jnp.maximum(jnp.log(1.0 - prob), -100.0)
                return -(tgt * lp + (1.0 - tgt) * lq)

            loss = 0.5 * jnp.mean(bce_term(1.0 - preds, y[:, 0:1]) +
                                  bce_term(preds, y[:, 1:2]))            # mean over 2*B elems
        else:
            loss = jnp.zeros((), jnp.float32)

        # ---- lane-dense (8,128) output slab: rows [0,B) = preds, row B.. = loss ----
        col = jnp.concatenate(
            [preds, jnp.broadcast_to(loss, (8 - B, 1)).astype(jnp.float32)], axis=0)  # (8,1)
        out_ref[...] = jnp.broadcast_to(col, (8, 128))

    return kernel


# ----------------------------- wrappers -----------------------------

def _fused_forward(params, ids, mask, labels, use_cos):
    with_labels = labels is not None
    kernel = make_fused_kernel(use_cos, with_labels)
    weights = (params["tok_emb"], params["pos_emb"],
               params["ln_e_g"], params["ln_e_b"],
               params["wq"], params["wk"], params["wv"], params["wo"],
               params["ln1_g"], params["ln1_b"],
               params["w1"], params["w2"],
               params["ln2_g"], params["ln2_b"])
    args = (ids, mask) + ((labels,) if with_labels else ()) + weights
    out = pl.pallas_call(
        kernel,
        out_shape=jax.ShapeDtypeStruct((8, 128), jnp.float32),
        in_specs=[_VMEM] * len(args),
        out_specs=_VMEM,
    )(*args)
    preds = out[:B, 0:1]        # (B, 1)
    loss = out[B, 0]            # scalar
    return preds, loss


def training_harness_forward(params, *, left, right, labels=None, use_cos=False):
    """Mirrors TrainingHarness.forward (single fused Pallas kernel per call)."""
    ids = jnp.concatenate([left["input_ids"], right["input_ids"]], axis=0)
    ids = ids.astype(jnp.int32).reshape(TOK, 1)
    mask = jnp.concatenate([left["attention_mask"], right["attention_mask"]], axis=0)
    mask = mask.astype(jnp.float32).reshape(NSEQ, 1, S)
    lab = None if labels is None else labels.astype(jnp.float32)
    preds, loss = _fused_forward(params, ids, mask, lab, use_cos)
    if labels is None:
        return preds
    return preds, loss


def init_params(key):
    ks = jax.random.split(key, 8)
    s = 0.02
    f32 = jnp.float32

    def padded(a, rows, cols):
        return jnp.pad(a, ((0, rows - a.shape[0]), (0, cols - a.shape[1])))

    return {
        "tok_emb": padded(s * jax.random.normal(ks[0], (V, H), f32), V, HP),
        "pos_emb": padded(s * jax.random.normal(ks[1], (S, H), f32), S, HP),
        "wq": padded(s * jax.random.normal(ks[2], (H, H), f32), HP, HP),
        "wk": padded(s * jax.random.normal(ks[3], (H, H), f32), HP, HP),
        "wv": padded(s * jax.random.normal(ks[4], (H, H), f32), HP, HP),
        "wo": padded(s * jax.random.normal(ks[5], (H, H), f32), HP, HP),
        "w1": padded(s * jax.random.normal(ks[6], (H, F), f32), HP, FP),
        "w2": padded(s * jax.random.normal(ks[7], (F, H), f32), FP, HP),
        # padded gamma/beta lanes are zero so padded hidden lanes stay exactly zero.
        "ln_e_g": padded(jnp.ones((1, H), f32), 1, HP), "ln_e_b": jnp.zeros((1, HP), f32),
        "ln1_g": padded(jnp.ones((1, H), f32), 1, HP), "ln1_b": jnp.zeros((1, HP), f32),
        "ln2_g": padded(jnp.ones((1, H), f32), 1, HP), "ln2_b": jnp.zeros((1, HP), f32),
    }


if __name__ == "__main__":
    key = jax.random.PRNGKey(0)
    kp, kl, kr = jax.random.split(key, 3)
    params = init_params(kp)

    left = {
        "input_ids": jax.random.randint(kl, (B, S), 0, V, dtype=jnp.int32),
        "attention_mask": jnp.array([[1] * S, [1] * (S - 2) + [0, 0]], dtype=jnp.int32),
    }
    right = {
        "input_ids": jax.random.randint(kr, (B, S), 0, V, dtype=jnp.int32),
        "attention_mask": jnp.ones((B, S), dtype=jnp.int32),
    }
    labels = jnp.array([[0.0, 1.0], [0.0, 1.0]], dtype=jnp.float32)

    # no-label path: use_cos=False -> batch_dot combine
    preds = training_harness_forward(params, left=left, right=right, labels=None, use_cos=False)

    # label path: use_cos=True, left vs left so cosine preds lie in [0, 1] (valid BCE input)
    preds2, loss = training_harness_forward(params, left=left, right=left,
                                            labels=labels, use_cos=True)

    jax.block_until_ready((preds, preds2, loss))
    print("KERNEL_OK")
</pallas_src>

<mosaic_0001>
module attributes {stable_mosaic.version = 11 : i64} {
  func.func @kernel(%arg0: memref<32x1xi32, #tpu.memory_space<vmem>>, %arg1: memref<4x1x8xf32, #tpu.memory_space<vmem>>, %arg2: memref<64x128xf32, #tpu.memory_space<vmem>>, %arg3: memref<8x128xf32, #tpu.memory_space<vmem>>, %arg4: memref<1x128xf32, #tpu.memory_space<vmem>>, %arg5: memref<1x128xf32, #tpu.memory_space<vmem>>, %arg6: memref<128x128xf32, #tpu.memory_space<vmem>>, %arg7: memref<128x128xf32, #tpu.memory_space<vmem>>, %arg8: memref<128x128xf32, #tpu.memory_space<vmem>>, %arg9: memref<128x128xf32, #tpu.memory_space<vmem>>, %arg10: memref<1x128xf32, #tpu.memory_space<vmem>>, %arg11: memref<1x128xf32, #tpu.memory_space<vmem>>, %arg12: memref<128x128xf32, #tpu.memory_space<vmem>>, %arg13: memref<128x128xf32, #tpu.memory_space<vmem>>, %arg14: memref<1x128xf32, #tpu.memory_space<vmem>>, %arg15: memref<1x128xf32, #tpu.memory_space<vmem>>, %arg16: memref<8x128xf32, #tpu.memory_space<vmem>>) attributes {dimension_semantics = [], scalar_prefetch = 0 : i64, scratch_operands = 0 : i64, tpu.core_type = #tpu.core_type<tc>} {
    %c0 = arith.constant 0 : index
    %c0_0 = arith.constant 0 : index
    %0 = vector.load %arg0[%c0, %c0_0] : memref<32x1xi32, #tpu.memory_space<vmem>>, vector<32x1xi32>
    %1 = tpu.iota {dimensions = array<i32: 1>} : vector<32x64xi32>
    %2 = vector.broadcast %0 : vector<32x1xi32> to vector<32x64xi32>
    %3 = arith.cmpi eq, %2, %1 : vector<32x64xi32>
    %4 = arith.extui %3 : vector<32x64xi1> to vector<32x64xi32>
    %5 = arith.sitofp %4 : vector<32x64xi32> to vector<32x64xf32>
    %c0_1 = arith.constant 0 : index
    %c0_2 = arith.constant 0 : index
    %6 = vector.load %arg2[%c0_1, %c0_2] : memref<64x128xf32, #tpu.memory_space<vmem>>, vector<64x128xf32>
    %cst = arith.constant dense<0.000000e+00> : vector<32x128xf32>
    %7 = tpu.matmul %5, %6, %cst {dimension_numbers = #tpu.dot_dimension_numbers<[1], [0], [0], [1], [0, 0, 1, 1], [], []>} : vector<32x64xf32>, vector<64x128xf32>, vector<32x128xf32> -> vector<32x128xf32>
    %8 = vector.shape_cast %7 : vector<32x128xf32> to vector<4x8x128xf32>
    %c0_3 = arith.constant 0 : index
    %c0_4 = arith.constant 0 : index
    %9 = vector.load %arg3[%c0_3, %c0_4] : memref<8x128xf32, #tpu.memory_space<vmem>>, vector<8x128xf32>
    %10 = vector.shape_cast %9 : vector<8x128xf32> to vector<1x8x128xf32>
    %11 = vector.broadcast %10 : vector<1x8x128xf32> to vector<4x8x128xf32>
    %12 = arith.addf %8, %11 : vector<4x8x128xf32>
    %c0_5 = arith.constant 0 : index
    %c0_6 = arith.constant 0 : index
    %13 = vector.load %arg4[%c0_5, %c0_6] : memref<1x128xf32, #tpu.memory_space<vmem>>, vector<1x128xf32>
    %c0_7 = arith.constant 0 : index
    %c0_8 = arith.constant 0 : index
    %14 = vector.load %arg5[%c0_7, %c0_8] : memref<1x128xf32, #tpu.memory_space<vmem>>, vector<1x128xf32>
    %cst_9 = arith.constant dense<0.000000e+00> : vector<4x8xf32>
    %15 = vector.multi_reduction <add>, %12, %cst_9 [2] : vector<4x8x128xf32> to vector<4x8xf32>
    %16 = vector.shape_cast %15 : vector<4x8xf32> to vector<4x8x1xf32>
    %cst_10 = arith.constant 3.125000e-02 : f32
    %17 = vector.broadcast %cst_10 : f32 to vector<4x8x1xf32>
    %18 = arith.mulf %16, %17 : vector<4x8x1xf32>
    %19 = arith.mulf %12, %12 : vector<4x8x128xf32>
    %cst_11 = arith.constant dense<0.000000e+00> : vector<4x8xf32>
    %20 = vector.multi_reduction <add>, %19, %cst_11 [2] : vector<4x8x128xf32> to vector<4x8xf32>
    %21 = vector.shape_cast %20 : vector<4x8xf32> to vector<4x8x1xf32>
    %cst_12 = arith.constant 3.125000e-02 : f32
    %22 = vector.broadcast %cst_12 : f32 to vector<4x8x1xf32>
    %23 = arith.mulf %21, %22 : vector<4x8x1xf32>
    %24 = arith.mulf %18, %18 : vector<4x8x1xf32>
    %25 = arith.subf %23, %24 : vector<4x8x1xf32>
    %cst_13 = arith.constant 0.000000e+00 : f32
    %26 = vector.broadcast %cst_13 : f32 to vector<4x8x1xf32>
    %27 = arith.maximumf %25, %26 : vector<4x8x1xf32>
    %28 = vector.broadcast %18 : vector<4x8x1xf32> to vector<4x8x128xf32>
    %29 = arith.subf %12, %28 : vector<4x8x128xf32>
    %cst_14 = arith.constant 9.99999996E-13 : f32
    %30 = vector.broadcast %cst_14 : f32 to vector<4x8x1xf32>
    %31 = arith.addf %27, %30 : vector<4x8x1xf32>
    %32 = math.rsqrt %31 : vector<4x8x1xf32>
    %33 = vector.broadcast %32 : vector<4x8x1xf32> to vector<4x8x128xf32>
    %34 = arith.mulf %29, %33 : vector<4x8x128xf32>
    %35 = vector.shape_cast %13 : vector<1x128xf32> to vector<1x1x128xf32>
    %36 = vector.broadcast %35 : vector<1x1x128xf32> to vector<4x8x128xf32>
    %37 = arith.mulf %34, %36 : vector<4x8x128xf32>
    %38 = vector.shape_cast %14 : vector<1x128xf32> to vector<1x1x128xf32>
    %39 = vector.broadcast %38 : vector<1x1x128xf32> to vector<4x8x128xf32>
    %40 = arith.addf %37, %39 : vector<4x8x128xf32>
    %41 = vector.shape_cast %40 : vector<4x8x128xf32> to vector<32x128xf32>
    %c0_15 = arith.constant 0 : index
    %c0_16 = arith.constant 0 : index
    %42 = vector.load %arg6[%c0_15, %c0_16] : memref<128x128xf32, #tpu.memory_space<vmem>>, vector<128x128xf32>
    %cst_17 = arith.constant dense<0.000000e+00> : vector<32x128xf32>
    %43 = tpu.matmul %41, %42, %cst_17 {dimension_numbers = #tpu.dot_dimension_numbers<[1], [0], [0], [1], [0, 0, 1, 1], [], []>} : vector<32x128xf32>, vector<128x128xf32>, vector<32x128xf32> -> vector<32x128xf32>
    %44 = vector.shape_cast %43 : vector<32x128xf32> to vector<4x8x128xf32>
    %c0_18 = arith.constant 0 : index
    %c0_19 = arith.constant 0 : index
    %45 = vector.load %arg7[%c0_18, %c0_19] : memref<128x128xf32, #tpu.memory_space<vmem>>, vector<128x128xf32>
    %cst_20 = arith.constant dense<0.000000e+00> : vector<32x128xf32>
    %46 = tpu.matmul %41, %45, %cst_20 {dimension_numbers = #tpu.dot_dimension_numbers<[1], [0], [0], [1], [0, 0, 1, 1], [], []>} : vector<32x128xf32>, vector<128x128xf32>, vector<32x128xf32> -> vector<32x128xf32>
    %47 = vector.shape_cast %46 : vector<32x128xf32> to vector<4x8x128xf32>
    %c0_21 = arith.constant 0 : index
    %c0_22 = arith.constant 0 : index
    %48 = vector.load %arg8[%c0_21, %c0_22] : memref<128x128xf32, #tpu.memory_space<vmem>>, vector<128x128xf32>
    %cst_23 = arith.constant dense<0.000000e+00> : vector<32x128xf32>
    %49 = tpu.matmul %41, %48, %cst_23 {dimension_numbers = #tpu.dot_dimension_numbers<[1], [0], [0], [1], [0, 0, 1, 1], [], []>} : vector<32x128xf32>, vector<128x128xf32>, vector<32x128xf32> -> vector<32x128xf32>
    %50 = vector.shape_cast %49 : vector<32x128xf32> to vector<4x8x128xf32>
    "tpu.trace_start"() <{level = 10 : i32, message = "bqd,bkd->bqk"}> : () -> ()
    %cst_24 = arith.constant dense<0.000000e+00> : vector<4x8x8xf32>
    %51 = tpu.matmul %44, %47, %cst_24 {dimension_numbers = #tpu.dot_dimension_numbers<[2], [2], [1], [1], [0, 0, 0, 1, 1, 1], [0], [0]>} : vector<4x8x128xf32>, vector<4x8x128xf32>, vector<4x8x8xf32> -> vector<4x8x8xf32>
    "tpu.trace_stop"() : () -> ()
    %cst_25 = arith.constant 0.176776692 : f32
    %52 = vector.broadcast %cst_25 : f32 to vector<4x8x8xf32>
    %53 = arith.mulf %51, %52 : vector<4x8x8xf32>
    %c0_26 = arith.constant 0 : index
    %c0_27 = arith.constant 0 : index
    %c0_28 = arith.constant 0 : index
    %54 = vector.load %arg1[%c0_26, %c0_27, %c0_28] : memref<4x1x8xf32, #tpu.memory_space<vmem>>, vector<4x1x8xf32>
    %cst_29 = arith.constant 1.000000e+00 : f32
    %55 = vector.broadcast %cst_29 : f32 to vector<4x1x8xf32>
    %56 = arith.subf %54, %55 : vector<4x1x8xf32>
    %cst_30 = arith.constant 1.000000e+09 : f32
    %57 = vector.broadcast %cst_30 : f32 to vector<4x1x8xf32>
    %58 = arith.mulf %56, %57 : vector<4x1x8xf32>
    %59 = vector.broadcast %58 : vector<4x1x8xf32> to vector<4x8x8xf32>
    %60 = arith.addf %53, %59 : vector<4x8x8xf32>
    %cst_31 = arith.constant dense<0xFF800000> : vector<4x8xf32>
    %61 = vector.multi_reduction <maximumf>, %60, %cst_31 [2] : vector<4x8x8xf32> to vector<4x8xf32>
    %62 = vector.shape_cast %61 : vector<4x8xf32> to vector<4x8x1xf32>
    %63 = vector.broadcast %62 : vector<4x8x1xf32> to vector<4x8x8xf32>
    %64 = arith.subf %60, %63 : vector<4x8x8xf32>
    %65 = math.exp %64 : vector<4x8x8xf32>
    %cst_32 = arith.constant dense<0.000000e+00> : vector<4x8xf32>
    %66 = vector.multi_reduction <add>, %65, %cst_32 [2] : vector<4x8x8xf32> to vector<4x8xf32>
    %67 = vector.shape_cast %66 : vector<4x8xf32> to vector<4x8x1xf32>
    %68 = tpu.reciprocal %67 {approx = true} : vector<4x8x1xf32> -> vector<4x8x1xf32>
    %69 = vector.broadcast %68 : vector<4x8x1xf32> to vector<4x8x8xf32>
    %70 = arith.mulf %65, %69 : vector<4x8x8xf32>
    "tpu.trace_start"() <{level = 10 : i32, message = "bqk,bkd->bqd"}> : () -> ()
    %cst_33 = arith.constant dense<0.000000e+00> : vector<4x8x128xf32>
    %71 = tpu.matmul %70, %50, %cst_33 {dimension_numbers = #tpu.dot_dimension_numbers<[2], [1], [1], [2], [0, 0, 0, 1, 1, 2], [0], [0]>} : vector<4x8x8xf32>, vector<4x8x128xf32>, vector<4x8x128xf32> -> vector<4x8x128xf32>
    "tpu.trace_stop"() : () -> ()
    %72 = vector.shape_cast %71 : vector<4x8x128xf32> to vector<32x128xf32>
    %c0_34 = arith.constant 0 : index
    %c0_35 = arith.constant 0 : index
    %73 = vector.load %arg9[%c0_34, %c0_35] : memref<128x128xf32, #tpu.memory_space<vmem>>, vector<128x128xf32>
    %cst_36 = arith.constant dense<0.000000e+00> : vector<32x128xf32>
    %74 = tpu.matmul %72, %73, %cst_36 {dimension_numbers = #tpu.dot_dimension_numbers<[1], [0], [0], [1], [0, 0, 1, 1], [], []>} : vector<32x128xf32>, vector<128x128xf32>, vector<32x128xf32> -> vector<32x128xf32>
    %75 = vector.shape_cast %74 : vector<32x128xf32> to vector<4x8x128xf32>
    %76 = arith.addf %40, %75 : vector<4x8x128xf32>
    %c0_37 = arith.constant 0 : index
    %c0_38 = arith.constant 0 : index
    %77 = vector.load %arg10[%c0_37, %c0_38] : memref<1x128xf32, #tpu.memory_space<vmem>>, vector<1x128xf32>
    %c0_39 = arith.constant 0 : index
    %c0_40 = arith.constant 0 : index
    %78 = vector.load %arg11[%c0_39, %c0_40] : memref<1x128xf32, #tpu.memory_space<vmem>>, vector<1x128xf32>
    %cst_41 = arith.constant dense<0.000000e+00> : vector<4x8xf32>
    %79 = vector.multi_reduction <add>, %76, %cst_41 [2] : vector<4x8x128xf32> to vector<4x8xf32>
    %80 = vector.shape_cast %79 : vector<4x8xf32> to vector<4x8x1xf32>
    %cst_42 = arith.constant 3.125000e-02 : f32
    %81 = vector.broadcast %cst_42 : f32 to vector<4x8x1xf32>
    %82 = arith.mulf %80, %81 : vector<4x8x1xf32>
    %83 = arith.mulf %76, %76 : vector<4x8x128xf32>
    %cst_43 = arith.constant dense<0.000000e+00> : vector<4x8xf32>
    %84 = vector.multi_reduction <add>, %83, %cst_43 [2] : vector<4x8x128xf32> to vector<4x8xf32>
    %85 = vector.shape_cast %84 : vector<4x8xf32> to vector<4x8x1xf32>
    %cst_44 = arith.constant 3.125000e-02 : f32
    %86 = vector.broadcast %cst_44 : f32 to vector<4x8x1xf32>
    %87 = arith.mulf %85, %86 : vector<4x8x1xf32>
    %88 = arith.mulf %82, %82 : vector<4x8x1xf32>
    %89 = arith.subf %87, %88 : vector<4x8x1xf32>
    %cst_45 = arith.constant 0.000000e+00 : f32
    %90 = vector.broadcast %cst_45 : f32 to vector<4x8x1xf32>
    %91 = arith.maximumf %89, %90 : vector<4x8x1xf32>
    %92 = vector.broadcast %82 : vector<4x8x1xf32> to vector<4x8x128xf32>
    %93 = arith.subf %76, %92 : vector<4x8x128xf32>
    %cst_46 = arith.constant 9.99999996E-13 : f32
    %94 = vector.broadcast %cst_46 : f32 to vector<4x8x1xf32>
    %95 = arith.addf %91, %94 : vector<4x8x1xf32>
    %96 = math.rsqrt %95 : vector<4x8x1xf32>
    %97 = vector.broadcast %96 : vector<4x8x1xf32> to vector<4x8x128xf32>
    %98 = arith.mulf %93, %97 : vector<4x8x128xf32>
    %99 = vector.shape_cast %77 : vector<1x128xf32> to vector<1x1x128xf32>
    %100 = vector.broadcast %99 : vector<1x1x128xf32> to vector<4x8x128xf32>
    %101 = arith.mulf %98, %100 : vector<4x8x128xf32>
    %102 = vector.shape_cast %78 : vector<1x128xf32> to vector<1x1x128xf32>
    %103 = vector.broadcast %102 : vector<1x1x128xf32> to vector<4x8x128xf32>
    %104 = arith.addf %101, %103 : vector<4x8x128xf32>
    %105 = vector.shape_cast %104 : vector<4x8x128xf32> to vector<32x128xf32>
    %c0_47 = arith.constant 0 : index
    %c0_48 = arith.constant 0 : index
    %106 = vector.load %arg12[%c0_47, %c0_48] : memref<128x128xf32, #tpu.memory_space<vmem>>, vector<128x128xf32>
    %cst_49 = arith.constant dense<0.000000e+00> : vector<32x128xf32>
    %107 = tpu.matmul %105, %106, %cst_49 {dimension_numbers = #tpu.dot_dimension_numbers<[1], [0], [0], [1], [0, 0, 1, 1], [], []>} : vector<32x128xf32>, vector<128x128xf32>, vector<32x128xf32> -> vector<32x128xf32>
    %108 = arith.mulf %107, %107 : vector<32x128xf32>
    %109 = arith.mulf %107, %108 : vector<32x128xf32>
    %cst_50 = arith.constant 4.471500e-02 : f32
    %110 = vector.broadcast %cst_50 : f32 to vector<32x128xf32>
    %111 = arith.mulf %110, %109 : vector<32x128xf32>
    %112 = arith.addf %107, %111 : vector<32x128xf32>
    %cst_51 = arith.constant 0.797884583 : f32
    %113 = vector.broadcast %cst_51 : f32 to vector<32x128xf32>
    %114 = arith.mulf %113, %112 : vector<32x128xf32>
    %115 = math.tanh %114 : vector<32x128xf32>
    %cst_52 = arith.constant 1.000000e+00 : f32
    %116 = vector.broadcast %cst_52 : f32 to vector<32x128xf32>
    %117 = arith.addf %116, %115 : vector<32x128xf32>
    %cst_53 = arith.constant 5.000000e-01 : f32
    %118 = vector.broadcast %cst_53 : f32 to vector<32x128xf32>
    %119 = arith.mulf %118, %117 : vector<32x128xf32>
    %120 = arith.mulf %107, %119 : vector<32x128xf32>
    %c0_54 = arith.constant 0 : index
    %c0_55 = arith.constant 0 : index
    %121 = vector.load %arg13[%c0_54, %c0_55] : memref<128x128xf32, #tpu.memory_space<vmem>>, vector<128x128xf32>
    %cst_56 = arith.constant dense<0.000000e+00> : vector<32x128xf32>
    %122 = tpu.matmul %120, %121, %cst_56 {dimension_numbers = #tpu.dot_dimension_numbers<[1], [0], [0], [1], [0, 0, 1, 1], [], []>} : vector<32x128xf32>, vector<128x128xf32>, vector<32x128xf32> -> vector<32x128xf32>
    %123 = vector.shape_cast %122 : vector<32x128xf32> to vector<4x8x128xf32>
    %124 = arith.addf %104, %123 : vector<4x8x128xf32>
    %c0_57 = arith.constant 0 : index
    %c0_58 = arith.constant 0 : index
    %125 = vector.load %arg14[%c0_57, %c0_58] : memref<1x128xf32, #tpu.memory_space<vmem>>, vector<1x128xf32>
    %c0_59 = arith.constant 0 : index
    %c0_60 = arith.constant 0 : index
    %126 = vector.load %arg15[%c0_59, %c0_60] : memref<1x128xf32, #tpu.memory_space<vmem>>, vector<1x128xf32>
    %cst_61 = arith.constant dense<0.000000e+00> : vector<4x8xf32>
    %127 = vector.multi_reduction <add>, %124, %cst_61 [2] : vector<4x8x128xf32> to vector<4x8xf32>
    %128 = vector.shape_cast %127 : vector<4x8xf32> to vector<4x8x1xf32>
    %cst_62 = arith.constant 3.125000e-02 : f32
    %129 = vector.broadcast %cst_62 : f32 to vector<4x8x1xf32>
    %130 = arith.mulf %128, %129 : vector<4x8x1xf32>
    %131 = arith.mulf %124, %124 : vector<4x8x128xf32>
    %cst_63 = arith.constant dense<0.000000e+00> : vector<4x8xf32>
    %132 = vector.multi_reduction <add>, %131, %cst_63 [2] : vector<4x8x128xf32> to vector<4x8xf32>
    %133 = vector.shape_cast %132 : vector<4x8xf32> to vector<4x8x1xf32>
    %cst_64 = arith.constant 3.125000e-02 : f32
    %134 = vector.broadcast %cst_64 : f32 to vector<4x8x1xf32>
    %135 = arith.mulf %133, %134 : vector<4x8x1xf32>
    %136 = arith.mulf %130, %130 : vector<4x8x1xf32>
    %137 = arith.subf %135, %136 : vector<4x8x1xf32>
    %cst_65 = arith.constant 0.000000e+00 : f32
    %138 = vector.broadcast %cst_65 : f32 to vector<4x8x1xf32>
    %139 = arith.maximumf %137, %138 : vector<4x8x1xf32>
    %140 = vector.broadcast %130 : vector<4x8x1xf32> to vector<4x8x128xf32>
    %141 = arith.subf %124, %140 : vector<4x8x128xf32>
    %cst_66 = arith.constant 9.99999996E-13 : f32
    %142 = vector.broadcast %cst_66 : f32 to vector<4x8x1xf32>
    %143 = arith.addf %139, %142 : vector<4x8x1xf32>
    %144 = math.rsqrt %143 : vector<4x8x1xf32>
    %145 = vector.broadcast %144 : vector<4x8x1xf32> to vector<4x8x128xf32>
    %146 = arith.mulf %141, %145 : vector<4x8x128xf32>
    %147 = vector.shape_cast %125 : vector<1x128xf32> to vector<1x1x128xf32>
    %148 = vector.broadcast %147 : vector<1x1x128xf32> to vector<4x8x128xf32>
    %149 = arith.mulf %146, %148 : vector<4x8x128xf32>
    %150 = vector.shape_cast %126 : vector<1x128xf32> to vector<1x1x128xf32>
    %151 = vector.broadcast %150 : vector<1x1x128xf32> to vector<4x8x128xf32>
    %152 = arith.addf %149, %151 : vector<4x8x128xf32>
    %cst_67 = arith.constant dense<0.000000e+00> : vector<4x128xf32>
    %153 = vector.multi_reduction <add>, %152, %cst_67 [1] : vector<4x8x128xf32> to vector<4x128xf32>
    %cst_68 = arith.constant 8.000000e+00 : f32
    %154 = vector.broadcast %cst_68 : f32 to vector<4x128xf32>
    %155 = arith.divf %153, %154 : vector<4x128xf32>
    %156 = vector.extract_strided_slice %155 {offsets = [0, 0], sizes = [2, 128], strides = [1, 1]} : vector<4x128xf32> to vector<2x128xf32>
    %157 = vector.extract_strided_slice %155 {offsets = [2, 0], sizes = [2, 128], strides = [1, 1]} : vector<4x128xf32> to vector<2x128xf32>
    %158 = arith.mulf %156, %157 : vector<2x128xf32>
    %cst_69 = arith.constant dense<0.000000e+00> : vector<2xf32>
    %159 = vector.multi_reduction <add>, %158, %cst_69 [1] : vector<2x128xf32> to vector<2xf32>
    %160 = vector.shape_cast %159 : vector<2xf32> to vector<2x1xf32>
    %cst_70 = arith.constant 0.000000e+00 : f32
    %161 = vector.broadcast %cst_70 : f32 to vector<6x1xf32>
    %162 = tpu.concatenate %160, %161 in 0 : vector<2x1xf32>, vector<6x1xf32> -> vector<8x1xf32>
    %163 = vector.shape_cast %162 : vector<8x1xf32> to vector<8x1xf32>
    %164 = vector.broadcast %163 : vector<8x1xf32> to vector<8x128xf32>
    %c0_71 = arith.constant 0 : index
    %c0_72 = arith.constant 0 : index
    %165 = vector.load %arg16[%c0_71, %c0_72] : memref<8x128xf32, #tpu.memory_space<vmem>>, vector<8x128xf32>
    tpu.vector_store %arg16[%c0_71, %c0_72], %164 {strides = array<i32>} : memref<8x128xf32, #tpu.memory_space<vmem>>, vector<8x128xf32>,
    return
  }
}

</mosaic_0001>

<llo_original>
// kernel: tpu_custom_call.1
$region0: #{tpu_custom_call.1}
  #allocation0 [shape = 'u32[]', space=smem, size = 0x4, offset = 0x4, fixed_abs, tag = 'smem constant byte address 0x4 - core index']
  #allocation1 [shape = 'u32[72,128]{1,0:T(1,128)}', space=vmem, size = 0x9000, scoped, tag = 'internal scratch']
  %s0 = inlined_call_operand.vmem [shape: s32[32,1], index: 0, kind: input, shape index: {}]
  %s1 = inlined_call_operand.vmem [shape: f32[4,1,8], index: 1, kind: input, shape index: {}]
  %s2 = inlined_call_operand.hbm [shape: f32[64,128], index: 2, kind: input, shape index: {}]
  %s3 = inlined_call_operand.vmem [shape: f32[8,128], index: 3, kind: input, shape index: {}]
  %s4 = inlined_call_operand.vmem [shape: f32[1,128], index: 4, kind: input, shape index: {}]
  %s5 = inlined_call_operand.vmem [shape: f32[1,128], index: 5, kind: input, shape index: {}]
  %s6 = inlined_call_operand.hbm [shape: f32[128,128], index: 6, kind: input, shape index: {}]
  %s7 = inlined_call_operand.hbm [shape: f32[128,128], index: 7, kind: input, shape index: {}]
  %s8 = inlined_call_operand.hbm [shape: f32[128,128], index: 8, kind: input, shape index: {}]
  %s9 = inlined_call_operand.hbm [shape: f32[128,128], index: 9, kind: input, shape index: {}]
  %s10 = inlined_call_operand.vmem [shape: f32[1,128], index: 10, kind: input, shape index: {}]
  %s11 = inlined_call_operand.vmem [shape: f32[1,128], index: 11, kind: input, shape index: {}]
  %s12 = inlined_call_operand.hbm [shape: f32[128,128], index: 12, kind: input, shape index: {}]
  %s13 = inlined_call_operand.hbm [shape: f32[128,128], index: 13, kind: input, shape index: {}]
  %s14 = inlined_call_operand.vmem [shape: f32[1,128], index: 14, kind: input, shape index: {}]
  %s15 = inlined_call_operand.vmem [shape: f32[1,128], index: 15, kind: input, shape index: {}]
  %s16 = inlined_call_operand.hbm [shape: f32[8,128], index: 16, kind: output, shape index: {}]
  %s17 = sld [smem:[#allocation0]]
  $region102: #{tpu_custom_call.1} parent=0
    _
  %s19 = ssub.s32 1, %s17
  %s20 = scalar_select 0, %s19, %s17
  $region1: #{tpu_custom_call.1} parent=0
    #allocation2 [shape = 'u8[32768]{0}', space=vmem, size = 0x8000, scoped, tag = 'input window, operand 2, single buffered']
    #allocation3 [shape = 's32[1]{0}', space=sflag, size = 0x4, scoped, tag = 'scoped memory for tpu_custom_call.1']
    #allocation4 [shape = 's32[1]{0}', space=sflag, size = 0x4, scoped, tag = 'scoped memory for tpu_custom_call.1']
    #allocation5 [shape = 'u8[65536]{0}', space=vmem, size = 0x10000, scoped, tag = 'input window, operand 6, single buffered']
    #allocation6 [shape = 's32[1]{0}', space=sflag, size = 0x4, scoped, tag = 'scoped memory for tpu_custom_call.1']
    #allocation7 [shape = 'u8[65536]{0}', space=vmem, size = 0x10000, scoped, tag = 'input window, operand 7, single buffered']
    #allocation8 [shape = 'u8[65536]{0}', space=vmem, size = 0x10000, scoped, tag = 'input window, operand 8, single buffered']
    #allocation9 [shape = 's32[1]{0}', space=sflag, size = 0x4, scoped, tag = 'scoped memory for tpu_custom_call.1']
    #allocation10 [shape = 'u8[65536]{0}', space=vmem, size = 0x10000, scoped, tag = 'input window, operand 9, single buffered']
    #allocation11 [shape = 'u8[65536]{0}', space=vmem, size = 0x10000, scoped, tag = 'input window, operand 12, single buffered']
    #allocation12 [shape = 's32[1]{0}', space=sflag, size = 0x4, scoped, tag = 'scoped memory for tpu_custom_call.1']
    #allocation13 [shape = 'u8[65536]{0}', space=vmem, size = 0x10000, scoped, tag = 'input window, operand 13, single buffered']
    #allocation14 [shape = 'u8[4096]{0}', space=vmem, size = 0x1000, scoped, tag = 'output window, operand 0, single buffered']
    %21 = vsyncpa [#allocation3], 0
    %22 = vsyncpa [#allocation6], 0
    %23 = vsyncpa [#allocation9], 0
    %24 = vsyncpa [#allocation12], 0
    %25 = vsyncpa [#allocation4], 0
    // Predicated region
    $region2: #{tpu_custom_call.1} parent=1 // pred_check
      _
    $region3: #{tpu_custom_call.1} parent=1 // pred_check_branch
      %27 = sbr.rel (0) target = $region5
    $region4: #{tpu_custom_call.1} parent=1 // pred_region
      _
    $region5: #{tpu_custom_call.1} parent=1 // pred_fallthru
      _
    // Predicated region
    $region6: #{tpu_custom_call.1} parent=1 // pred_check
      _
    $region7: #{tpu_custom_call.1} parent=1 // pred_check_branch
      %29 = sbr.rel (0) target = $region9
    $region8: #{tpu_custom_call.1} parent=1 // pred_region
      _
    $region9: #{tpu_custom_call.1} parent=1 // pred_fallthru
      _
    // Predicated region
    $region10: #{tpu_custom_call.1} parent=1 // pred_check
      _
    $region11: #{tpu_custom_call.1} parent=1 // pred_check_branch
      %31 = sbr.rel (0) target = $region13
    $region12: #{tpu_custom_call.1} parent=1 // pred_region
      %33 = vsyncadd [#allocation3], 0
      %s34 = sshll.u32 %s2, 4
      %s35 = int_to_ptr.hbm [resolvable:$true] %s34
      %s36 = sshll.u32 [#allocation2], 4
      %s37 = int_to_ptr.vmem [resolvable:$true] %s36
      %42 = dma.hbm_to_vmem [thread:$0]  %s35, 1024, %s37, [#allocation3], 128, 128, 8
    $region13: #{tpu_custom_call.1} parent=1 // pred_fallthru
      _
    // Predicated region
    $region14: #{tpu_custom_call.1} parent=1 // pred_check
      _
    $region15: #{tpu_custom_call.1} parent=1 // pred_check_branch
      %44 = sbr.rel (0) target = $region17
    $region16: #{tpu_custom_call.1} parent=1 // pred_region
      _
    $region17: #{tpu_custom_call.1} parent=1 // pred_fallthru
      _
    // Predicated region
    $region18: #{tpu_custom_call.1} parent=1 // pred_check
      _
    $region19: #{tpu_custom_call.1} parent=1 // pred_check_branch
      %46 = sbr.rel (0) target = $region21
    $region20: #{tpu_custom_call.1} parent=1 // pred_region
      _
    $region21: #{tpu_custom_call.1} parent=1 // pred_fallthru
      _
    // Predicated region
    $region22: #{tpu_custom_call.1} parent=1 // pred_check
      _
    $region23: #{tpu_custom_call.1} parent=1 // pred_check_branch
      %48 = sbr.rel (0) target = $region25
    $region24: #{tpu_custom_call.1} parent=1 // pred_region
      _
    $region25: #{tpu_custom_call.1} parent=1 // pred_fallthru
      _
    // Predicated region
    $region26: #{tpu_custom_call.1} parent=1 // pred_check
      _
    $region27: #{tpu_custom_call.1} parent=1 // pred_check_branch
      %50 = sbr.rel (0) target = $region29
    $region28: #{tpu_custom_call.1} parent=1 // pred_region
      %52 = vsyncadd [#allocation6], 0
      %s53 = sshll.u32 %s6, 4
      %s54 = int_to_ptr.hbm [resolvable:$true] %s53
      %s55 = sshll.u32 [#allocation5], 4
      %s56 = int_to_ptr.vmem [resolvable:$true] %s55
      %61 = dma.hbm_to_vmem [thread:$0]  %s54, 2048, %s56, [#allocation6], 128, 128, 8
    $region29: #{tpu_custom_call.1} parent=1 // pred_fallthru
      _
    // Predicated region
    $region30: #{tpu_custom_call.1} parent=1 // pred_check
      _
    $region31: #{tpu_custom_call.1} parent=1 // pred_check_branch
      %63 = sbr.rel (0) target = $region33
    $region32: #{tpu_custom_call.1} parent=1 // pred_region
      %65 = vsyncadd [#allocation6], 0
      %s66 = sshll.u32 %s7, 4
      %s67 = int_to_ptr.hbm [resolvable:$true] %s66
      %s68 = sshll.u32 [#allocation7], 4
      %s69 = int_to_ptr.vmem [resolvable:$true] %s68
      %74 = dma.hbm_to_vmem [thread:$0]  %s67, 2048, %s69, [#allocation6], 128, 128, 8
    $region33: #{tpu_custom_call.1} parent=1 // pred_fallthru
      _
    // Predicated region
    $region34: #{tpu_custom_call.1} parent=1 // pred_check
      _
    $region35: #{tpu_custom_call.1} parent=1 // pred_check_branch
      %76 = sbr.rel (0) target = $region37
    $region36: #{tpu_custom_call.1} parent=1 // pred_region
      %78 = vsyncadd [#allocation9], 0
      %s79 = sshll.u32 %s8, 4
      %s80 = int_to_ptr.hbm [resolvable:$true] %s79
      %s81 = sshll.u32 [#allocation8], 4
      %s82 = int_to_ptr.vmem [resolvable:$true] %s81
      %87 = dma.hbm_to_vmem [thread:$0]  %s80, 2048, %s82, [#allocation9], 128, 128, 8
    $region37: #{tpu_custom_call.1} parent=1 // pred_fallthru
      _
    // Predicated region
    $region38: #{tpu_custom_call.1} parent=1 // pred_check
      _
    $region39: #{tpu_custom_call.1} parent=1 // pred_check_branch
      %89 = sbr.rel (0) target = $region41
    $region40: #{tpu_custom_call.1} parent=1 // pred_region
      %91 = vsyncadd [#allocation9], 0
      %s92 = sshll.u32 %s9, 4
      %s93 = int_to_ptr.hbm [resolvable:$true] %s92
      %s94 = sshll.u32 [#allocation10], 4
      %s95 = int_to_ptr.vmem [resolvable:$true] %s94
      %100 = dma.hbm_to_vmem [thread:$0]  %s93, 2048, %s95, [#allocation9], 128, 128, 8
    $region41: #{tpu_custom_call.1} parent=1 // pred_fallthru
      _
    // Predicated region
    $region42: #{tpu_custom_call.1} parent=1 // pred_check
      _
    $region43: #{tpu_custom_call.1} parent=1 // pred_check_branch
      %102 = sbr.rel (0) target = $region45
    $region44: #{tpu_custom_call.1} parent=1 // pred_region
      _
    $region45: #{tpu_custom_call.1} parent=1 // pred_fallthru
      _
    // Predicated region
    $region46: #{tpu_custom_call.1} parent=1 // pred_check
      _
    $region47: #{tpu_custom_call.1} parent=1 // pred_check_branch
      %104 = sbr.rel (0) target = $region49
    $region48: #{tpu_custom_call.1} parent=1 // pred_region
      _
    $region49: #{tpu_custom_call.1} parent=1 // pred_fallthru
      _
    // Predicated region
    $region50: #{tpu_custom_call.1} parent=1 // pred_check
      _
    $region51: #{tpu_custom_call.1} parent=1 // pred_check_branch
      %106 = sbr.rel (0) target = $region53
    $region52: #{tpu_custom_call.1} parent=1 // pred_region
      %108 = vsyncadd [#allocation12], 0
      %s109 = sshll.u32 %s12, 4
      %s110 = int_to_ptr.hbm [resolvable:$true] %s109
      %s111 = sshll.u32 [#allocation11], 4
      %s112 = int_to_ptr.vmem [resolvable:$true] %s111
      %117 = dma.hbm_to_vmem [thread:$0]  %s110, 2048, %s112, [#allocation12], 128, 128, 8
    $region53: #{tpu_custom_call.1} parent=1 // pred_fallthru
      _
    // Predicated region
    $region54: #{tpu_custom_call.1} parent=1 // pred_check
      _
    $region55: #{tpu_custom_call.1} parent=1 // pred_check_branch
      %119 = sbr.rel (0) target = $region57
    $region56: #{tpu_custom_call.1} parent=1 // pred_region
      %121 = vsyncadd [#allocation12], 0
      %s122 = sshll.u32 %s13, 4
      %s123 = int_to_ptr.hbm [resolvable:$true] %s122
      %s124 = sshll.u32 [#allocation13], 4
      %s125 = int_to_ptr.vmem [resolvable:$true] %s124
      %130 = dma.hbm_to_vmem [thread:$0]  %s123, 2048, %s125, [#allocation12], 128, 128, 8
    $region57: #{tpu_custom_call.1} parent=1 // pred_fallthru
      _
    // Predicated region
    $region58: #{tpu_custom_call.1} parent=1 // pred_check
      _
    $region59: #{tpu_custom_call.1} parent=1 // pred_check_branch
      %132 = sbr.rel (0) target = $region61
    $region60: #{tpu_custom_call.1} parent=1 // pred_region
      _
    $region61: #{tpu_custom_call.1} parent=1 // pred_fallthru
      _
    // Predicated region
    $region62: #{tpu_custom_call.1} parent=1 // pred_check
      _
    $region63: #{tpu_custom_call.1} parent=1 // pred_check_branch
      %134 = sbr.rel (0) target = $region65
    $region64: #{tpu_custom_call.1} parent=1 // pred_region
      _
    $region65: #{tpu_custom_call.1} parent=1 // pred_fallthru
      _
    // Predicated region
    $region66: #{tpu_custom_call.1} parent=1 // pred_check
      _
    $region67: #{tpu_custom_call.1} parent=1 // pred_check_branch
      %136 = sbr.rel (0) target = $region69
    $region68: #{tpu_custom_call.1} parent=1 // pred_region
      %138 = dma.done [#allocation3], 1024
    $region69: #{tpu_custom_call.1} parent=1 // pred_fallthru
      _
    // Predicated region
    $region70: #{tpu_custom_call.1} parent=1 // pred_check
      _
    $region71: #{tpu_custom_call.1} parent=1 // pred_check_branch
      %140 = sbr.rel (0) target = $region73
    $region72: #{tpu_custom_call.1} parent=1 // pred_region
      %142 = dma.done [#allocation6], 2048
    $region73: #{tpu_custom_call.1} parent=1 // pred_fallthru
      _
    // Predicated region
    $region74: #{tpu_custom_call.1} parent=1 // pred_check
      _
    $region75: #{tpu_custom_call.1} parent=1 // pred_check_branch
      %144 = sbr.rel (0) target = $region77
    $region76: #{tpu_custom_call.1} parent=1 // pred_region
      %146 = dma.done [#allocation6], 2048
    $region77: #{tpu_custom_call.1} parent=1 // pred_fallthru
      _
    // Predicated region
    $region78: #{tpu_custom_call.1} parent=1 // pred_check
      _
    $region79: #{tpu_custom_call.1} parent=1 // pred_check_branch
      %148 = sbr.rel (0) target = $region81
    $region80: #{tpu_custom_call.1} parent=1 // pred_region
      %150 = dma.done [#allocation9], 2048
    $region81: #{tpu_custom_call.1} parent=1 // pred_fallthru
      _
    // Predicated region
    $region82: #{tpu_custom_call.1} parent=1 // pred_check
      _
    $region83: #{tpu_custom_call.1} parent=1 // pred_check_branch
      %152 = sbr.rel (0) target = $region85
    $region84: #{tpu_custom_call.1} parent=1 // pred_region
      %154 = dma.done [#allocation9], 2048
    $region85: #{tpu_custom_call.1} parent=1 // pred_fallthru
      _
    // Predicated region
    $region86: #{tpu_custom_call.1} parent=1 // pred_check
      _
    $region87: #{tpu_custom_call.1} parent=1 // pred_check_branch
      %156 = sbr.rel (0) target = $region89
    $region88: #{tpu_custom_call.1} parent=1 // pred_region
      %158 = dma.done [#allocation12], 2048
    $region89: #{tpu_custom_call.1} parent=1 // pred_fallthru
      _
    // Predicated region
    $region90: #{tpu_custom_call.1} parent=1 // pred_check
      _
    $region91: #{tpu_custom_call.1} parent=1 // pred_check_branch
      %160 = sbr.rel (0) target = $region93
    $region92: #{tpu_custom_call.1} parent=1 // pred_region
      %162 = dma.done [#allocation12], 2048
    $region93: #{tpu_custom_call.1} parent=1 // pred_fallthru
      _
    %v163 = vld [vmem:[%s0] sm:$0xff]
    %v164 = vld [vmem:[%s0 + $0x8] sm:$0xff]
    %v165 = vld [vmem:[%s0 + $0x10] sm:$0xff]
    %v166 = vld [vmem:[%s0 + $0x18] sm:$0xff]
    %v167 = vlaneseq
    %v168 = vand.u32 %v167, 127
    %169 = vset.pattern.permute.xlu0 0
    %170 = vperm.xlu0 %169, %v163
    %v171 = vpop.permute.xlu0 %170
    %172 = vset.pattern.permute.xlu0 0
    %173 = vperm.xlu0 %172, %v164
    %v174 = vpop.permute.xlu0 %173
    %175 = vset.pattern.permute.xlu0 0
    %176 = vperm.xlu0 %175, %v165
    %v177 = vpop.permute.xlu0 %176
    %178 = vset.pattern.permute.xlu0 0
    %179 = vperm.xlu0 %178, %v166
    %v180 = vpop.permute.xlu0 %179
    %vm181 = vcmp.eq.s32.totalorder %v171, %v168
    %vm182 = vcmp.eq.s32.totalorder %v174, %v168
    %vm183 = vcmp.eq.s32.totalorder %v177, %v168
    %vm184 = vcmp.eq.s32.totalorder %v180, %v168
    %v185 = vsel %vm181, 1, 0
    %v186 = vsel %vm182, 1, 0
    %v187 = vsel %vm183, 1, 0
    %v188 = vsel %vm184, 1, 0
    %v189 = vcvt.s32.f32 %v185
    %v190 = vcvt.s32.f32 %v186
    %v191 = vcvt.s32.f32 %v187
    %v192 = vcvt.s32.f32 %v188
    %v193 = vld [vmem:[#allocation2] sm:$0xff]
    %v194 = vld [vmem:[#allocation2 + $0x8] sm:$0xff]
    %v195 = vld [vmem:[#allocation2 + $0x10] sm:$0xff]
    %v196 = vld [vmem:[#allocation2 + $0x18] sm:$0xff]
    %v197 = vld [vmem:[#allocation2 + $0x20] sm:$0xff]
    %v198 = vld [vmem:[#allocation2 + $0x28] sm:$0xff]
    %v199 = vld [vmem:[#allocation2 + $0x30] sm:$0xff]
    %v200 = vld [vmem:[#allocation2 + $0x38] sm:$0xff]
    %vm201 = vcmask 523264
    %v203 = vsel %vm201, %v189, 0
    %v206 = vsel %vm201, %v190, 0
    %v209 = vsel %vm201, %v191, 0
    %v212 = vsel %vm201, %v192, 0
    %214 = vmatpush.msra.mxu0 0.0
    %215 = vmatpush.msra.mxu0 0.0
    %216 = vmatpush.msra.mxu0 0.0
    %217 = vmatpush.msra.mxu0 0.0
    %218 = vmatpush.msra.mxu0 0.0
    %219 = vmatpush.msra.mxu0 0.0
    %220 = vmatpush.msra.mxu0 0.0
    %221 = vmatpush.msra.mxu0 0.0
    %222 = vmatpush.msra.mxu0 %v200
    %223 = vmatpush.msra.mxu0 %v199
    %224 = vmatpush.msra.mxu0 %v198
    %225 = vmatpush.msra.mxu0 %v197
    %226 = vmatpush.msra.mxu0 %v196
    %227 = vmatpush.msra.mxu0 %v195
    %228 = vmatpush.msra.mxu0 %v194
    %229 = vmatpush.msra.mxu0 %v193
    %230 = vmatmul.f32.gmra.mxu0 %v203
    %v231 = vpop.f32.mrf.mxu0
    %v232 = vadd.f32 0.0, %v231
    %233 = vmatmul.f32.gmra.mxu0 %v206
    %v234 = vpop.f32.mrf.mxu0
    %v235 = vadd.f32 0.0, %v234
    %236 = vmatmul.f32.gmra.mxu0 %v209
    %v237 = vpop.f32.mrf.mxu0
    %v238 = vadd.f32 0.0, %v237
    %239 = vmatmul.f32.gmra.mxu0 %v212
    %v240 = vpop.f32.mrf.mxu0
    %v241 = vadd.f32 0.0, %v240
    %242 = vdwg.mxu0
    %v243 = vld [vmem:[%s3] sm:$0xff]
    %v244 = vadd.f32 %v232, %v243
    %v245 = vadd.f32 %v235, %v243
    %v246 = vadd.f32 %v238, %v243
    %v247 = vadd.f32 %v241, %v243
    %v248 = vld [vmem:[%s4] sm:$0x1]
    %v249 = vld [vmem:[%s5] sm:$0x1]
    %250 = vadd.xlane.f32.xlu0 %v244
    %v251 = vpop.xlane.xlu0 %250
    %252 = vadd.xlane.f32.xlu0 %v245
    %v253 = vpop.xlane.xlu0 %252
    %254 = vadd.xlane.f32.xlu0 %v246
    %v255 = vpop.xlane.xlu0 %254
    %256 = vadd.xlane.f32.xlu0 %v247
    %v257 = vpop.xlane.xlu0 %256
    %v258 = vmul.f32 %v251, 0.03125
    %v259 = vmul.f32 %v253, 0.03125
    %v260 = vmul.f32 %v255, 0.03125
    %v261 = vmul.f32 %v257, 0.03125
    %v262 = vmul.f32 %v244, %v244
    %v263 = vmul.f32 %v245, %v245
    %v264 = vmul.f32 %v246, %v246
    %v265 = vmul.f32 %v247, %v247
    %266 = vadd.xlane.f32.xlu0 %v262
    %v267 = vpop.xlane.xlu0 %266
    %268 = vadd.xlane.f32.xlu0 %v263
    %v269 = vpop.xlane.xlu0 %268
    %270 = vadd.xlane.f32.xlu0 %v264
    %v271 = vpop.xlane.xlu0 %270
    %272 = vadd.xlane.f32.xlu0 %v265
    %v273 = vpop.xlane.xlu0 %272
    %v274 = vmul.f32 %v267, 0.03125
    %v275 = vmul.f32 %v269, 0.03125
    %v276 = vmul.f32 %v271, 0.03125
    %v277 = vmul.f32 %v273, 0.03125
    %v278 = vmul.f32 %v258, %v258
    %v279 = vmul.f32 %v259, %v259
    %v280 = vmul.f32 %v260, %v260
    %v281 = vmul.f32 %v261, %v261
    %v282 = vsub.f32 %v274, %v278
    %v283 = vsub.f32 %v275, %v279
    %v284 = vsub.f32 %v276, %v280
    %v285 = vsub.f32 %v277, %v281
    %v286 = vmax.f32 %v282, 0.0
    %v287 = vmax.f32 %v283, 0.0
    %v288 = vmax.f32 %v284, 0.0
    %v289 = vmax.f32 %v285, 0.0
    %v290 = vsub.f32 %v244, %v258
    %v291 = vsub.f32 %v245, %v259
    %v292 = vsub.f32 %v246, %v260
    %v293 = vsub.f32 %v247, %v261
    %v294 = vadd.f32 %v286, 1e-12
    %v295 = vadd.f32 %v287, 1e-12
    %v296 = vadd.f32 %v288, 1e-12
    %v297 = vadd.f32 %v289, 1e-12
    %v298 = vrsqrt.pop %v294
    %v299 = vmul.f32 %v298, %v294
    %v300 = vmul.f32 %v299, %v298
    %v301 = vmul.f32 0.5, %v300
    %v302 = vsub.f32 1.5, %v301
    %v303 = vmul.f32 %v298, %v302
    %vm304 = vweird.f32 %v294
    %vm305 = vweird.f32 %v298
    %vm306 = vmor %vm304, %vm305
    %v307 = vsel %vm306, %v298, %v303
    %v308 = vrsqrt.pop %v295
    %v309 = vmul.f32 %v308, %v295
    %v310 = vmul.f32 %v309, %v308
    %v311 = vmul.f32 0.5, %v310
    %v312 = vsub.f32 1.5, %v311
    %v313 = vmul.f32 %v308, %v312
    %vm314 = vweird.f32 %v295
    %vm315 = vweird.f32 %v308
    %vm316 = vmor %vm314, %vm315
    %v317 = vsel %vm316, %v308, %v313
    %v318 = vrsqrt.pop %v296
    %v319 = vmul.f32 %v318, %v296
    %v320 = vmul.f32 %v319, %v318
    %v321 = vmul.f32 0.5, %v320
    %v322 = vsub.f32 1.5, %v321
    %v323 = vmul.f32 %v318, %v322
    %vm324 = vweird.f32 %v296
    %vm325 = vweird.f32 %v318
    %vm326 = vmor %vm324, %vm325
    %v327 = vsel %vm326, %v318, %v323
    %v328 = vrsqrt.pop %v297
    %v329 = vmul.f32 %v328, %v297
    %v330 = vmul.f32 %v329, %v328
    %v331 = vmul.f32 0.5, %v330
    %v332 = vsub.f32 1.5, %v331
    %v333 = vmul.f32 %v328, %v332
    %vm334 = vweird.f32 %v297
    %vm335 = vweird.f32 %v328
    %vm336 = vmor %vm334, %vm335
    %v337 = vsel %vm336, %v328, %v333
    %v338 = vmul.f32 %v290, %v307
    %v339 = vmul.f32 %v291, %v317
    %v340 = vmul.f32 %v292, %v327
    %v341 = vmul.f32 %v293, %v337
    %v343 = vperm.slane %v248, 0
    %v345 = vmul.f32 %v338, %v343
    %v346 = vmul.f32 %v339, %v343
    %v347 = vmul.f32 %v340, %v343
    %v348 = vmul.f32 %v341, %v343
    %v350 = vperm.slane %v249, 0
    %v352 = vadd.f32 %v345, %v350
    %v353 = vadd.f32 %v346, %v350
    %v354 = vadd.f32 %v347, %v350
    %v355 = vadd.f32 %v348, %v350
    %v356 = vld [vmem:[#allocation5] sm:$0xff]
    %v357 = vld [vmem:[#allocation5 + $0x8] sm:$0xff]
    %v358 = vld [vmem:[#allocation5 + $0x10] sm:$0xff]
    %v359 = vld [vmem:[#allocation5 + $0x18] sm:$0xff]
    %v360 = vld [vmem:[#allocation5 + $0x20] sm:$0xff]
    %v361 = vld [vmem:[#allocation5 + $0x28] sm:$0xff]
    %v362 = vld [vmem:[#allocation5 + $0x30] sm:$0xff]
    %v363 = vld [vmem:[#allocation5 + $0x38] sm:$0xff]
    %v364 = vld [vmem:[#allocation5 + $0x40] sm:$0xff]
    %v365 = vld [vmem:[#allocation5 + $0x48] sm:$0xff]
    %v366 = vld [vmem:[#allocation5 + $0x50] sm:$0xff]
    %v367 = vld [vmem:[#allocation5 + $0x58] sm:$0xff]
    %v368 = vld [vmem:[#allocation5 + $0x60] sm:$0xff]
    %v369 = vld [vmem:[#allocation5 + $0x68] sm:$0xff]
    %v370 = vld [vmem:[#allocation5 + $0x70] sm:$0xff]
    %v371 = vld [vmem:[#allocation5 + $0x78] sm:$0xff]
    %372 = vmatpush.msra.mxu0 %v371
    %373 = vmatpush.msra.mxu0 %v370
    %374 = vmatpush.msra.mxu0 %v369
    %375 = vmatpush.msra.mxu0 %v368
    %376 = vmatpush.msra.mxu0 %v367
    %377 = vmatpush.msra.mxu0 %v366
    %378 = vmatpush.msra.mxu0 %v365
    %379 = vmatpush.msra.mxu0 %v364
    %380 = vmatpush.msra.mxu0 %v363
    %381 = vmatpush.msra.mxu0 %v362
    %382 = vmatpush.msra.mxu0 %v361
    %383 = vmatpush.msra.mxu0 %v360
    %384 = vmatpush.msra.mxu0 %v359
    %385 = vmatpush.msra.mxu0 %v358
    %386 = vmatpush.msra.mxu0 %v357
    %387 = vmatpush.msra.mxu0 %v356
    %388 = vmatmul.f32.gmra.mxu0 %v352
    %v389 = vpop.f32.mrf.mxu0
    %v390 = vadd.f32 0.0, %v389
    %391 = vmatmul.f32.gmra.mxu0 %v353
    %v392 = vpop.f32.mrf.mxu0
    %v393 = vadd.f32 0.0, %v392
    %394 = vmatmul.f32.gmra.mxu0 %v354
    %v395 = vpop.f32.mrf.mxu0
    %v396 = vadd.f32 0.0, %v395
    %397 = vmatmul.f32.gmra.mxu0 %v355
    %v398 = vpop.f32.mrf.mxu0
    %v399 = vadd.f32 0.0, %v398
    %400 = vdwg.mxu0
    %v401 = vld [vmem:[#allocation7] sm:$0xff]
    %v402 = vld [vmem:[#allocation7 + $0x8] sm:$0xff]
    %v403 = vld [vmem:[#allocation7 + $0x10] sm:$0xff]
    %v404 = vld [vmem:[#allocation7 + $0x18] sm:$0xff]
    %v405 = vld [vmem:[#allocation7 + $0x20] sm:$0xff]
    %v406 = vld [vmem:[#allocation7 + $0x28] sm:$0xff]
    %v407 = vld [vmem:[#allocation7 + $0x30] sm:$0xff]
    %v408 = vld [vmem:[#allocation7 + $0x38] sm:$0xff]
    %v409 = vld [vmem:[#allocation7 + $0x40] sm:$0xff]
    %v410 = vld [vmem:[#allocation7 + $0x48] sm:$0xff]
    %v411 = vld [vmem:[#allocation7 + $0x50] sm:$0xff]
    %v412 = vld [vmem:[#allocation7 + $0x58] sm:$0xff]
    %v413 = vld [vmem:[#allocation7 + $0x60] sm:$0xff]
    %v414 = vld [vmem:[#allocation7 + $0x68] sm:$0xff]
    %v415 = vld [vmem:[#allocation7 + $0x70] sm:$0xff]
    %v416 = vld [vmem:[#allocation7 + $0x78] sm:$0xff]
    %417 = vmatpush.msra.mxu0 %v416
    %418 = vmatpush.msra.mxu0 %v415
    %419 = vmatpush.msra.mxu0 %v414
    %420 = vmatpush.msra.mxu0 %v413
    %421 = vmatpush.msra.mxu0 %v412
    %422 = vmatpush.msra.mxu0 %v411
    %423 = vmatpush.msra.mxu0 %v410
    %424 = vmatpush.msra.mxu0 %v409
    %425 = vmatpush.msra.mxu0 %v408
    %426 = vmatpush.msra.mxu0 %v407
    %427 = vmatpush.msra.mxu0 %v406
    %428 = vmatpush.msra.mxu0 %v405
    %429 = vmatpush.msra.mxu0 %v404
    %430 = vmatpush.msra.mxu0 %v403
    %431 = vmatpush.msra.mxu0 %v402
    %432 = vmatpush.msra.mxu0 %v401
    %433 = vmatmul.f32.gmra.mxu0 %v352
    %v434 = vpop.f32.mrf.mxu0
    %v435 = vadd.f32 0.0, %v434
    %436 = vmatmul.f32.gmra.mxu0 %v353
    %v437 = vpop.f32.mrf.mxu0
    %v438 = vadd.f32 0.0, %v437
    %439 = vmatmul.f32.gmra.mxu0 %v354
    %v440 = vpop.f32.mrf.mxu0
    %v441 = vadd.f32 0.0, %v440
    %442 = vmatmul.f32.gmra.mxu0 %v355
    %v443 = vpop.f32.mrf.mxu0
    %v444 = vadd.f32 0.0, %v443
    %445 = vdwg.mxu0
    %v446 = vld [vmem:[#allocation8] sm:$0xff]
    %v447 = vld [vmem:[#allocation8 + $0x8] sm:$0xff]
    %v448 = vld [vmem:[#allocation8 + $0x10] sm:$0xff]
    %v449 = vld [vmem:[#allocation8 + $0x18] sm:$0xff]
    %v450 = vld [vmem:[#allocation8 + $0x20] sm:$0xff]
    %v451 = vld [vmem:[#allocation8 + $0x28] sm:$0xff]
    %v452 = vld [vmem:[#allocation8 + $0x30] sm:$0xff]
    %v453 = vld [vmem:[#allocation8 + $0x38] sm:$0xff]
    %v454 = vld [vmem:[#allocation8 + $0x40] sm:$0xff]
    %v455 = vld [vmem:[#allocation8 + $0x48] sm:$0xff]
    %v456 = vld [vmem:[#allocation8 + $0x50] sm:$0xff]
    %v457 = vld [vmem:[#allocation8 + $0x58] sm:$0xff]
    %v458 = vld [vmem:[#allocation8 + $0x60] sm:$0xff]
    %v459 = vld [vmem:[#allocation8 + $0x68] sm:$0xff]
    %v460 = vld [vmem:[#allocation8 + $0x70] sm:$0xff]
    %v461 = vld [vmem:[#allocation8 + $0x78] sm:$0xff]
    %462 = vmatpush.msra.mxu0 %v461
    %463 = vmatpush.msra.mxu0 %v460
    %464 = vmatpush.msra.mxu0 %v459
    %465 = vmatpush.msra.mxu0 %v458
    %466 = vmatpush.msra.mxu0 %v457
    %467 = vmatpush.msra.mxu0 %v456
    %468 = vmatpush.msra.mxu0 %v455
    %469 = vmatpush.msra.mxu0 %v454
    %470 = vmatpush.msra.mxu0 %v453
    %471 = vmatpush.msra.mxu0 %v452
    %472 = vmatpush.msra.mxu0 %v451
    %473 = vmatpush.msra.mxu0 %v450
    %474 = vmatpush.msra.mxu0 %v449
    %475 = vmatpush.msra.mxu0 %v448
    %476 = vmatpush.msra.mxu0 %v447
    %477 = vmatpush.msra.mxu0 %v446
    %478 = vmatmul.f32.gmra.mxu0 %v352
    %v479 = vpop.f32.mrf.mxu0
    %v480 = vadd.f32 0.0, %v479
    %481 = vmatmul.f32.gmra.mxu0 %v353
    %v482 = vpop.f32.mrf.mxu0
    %v483 = vadd.f32 0.0, %v482
    %484 = vmatmul.f32.gmra.mxu0 %v354
    %v485 = vpop.f32.mrf.mxu0
    %v486 = vadd.f32 0.0, %v485
    %487 = vmatmul.f32.gmra.mxu0 %v355
    %v488 = vpop.f32.mrf.mxu0
    %v489 = vadd.f32 0.0, %v488
    %490 = vdwg.mxu0
    %491 = vmatpush.xpose.msra.mxu0 0.0
    %492 = vmatpush.xpose.msra.mxu0 0.0
    %493 = vmatpush.xpose.msra.mxu0 0.0
    %494 = vmatpush.xpose.msra.mxu0 0.0
    %495 = vmatpush.xpose.msra.mxu0 0.0
    %496 = vmatpush.xpose.msra.mxu0 0.0
    %497 = vmatpush.xpose.msra.mxu0 0.0
    %498 = vmatpush.xpose.msra.mxu0 0.0
    %499 = vmatpush.xpose.msra.mxu0 0.0
    %500 = vmatpush.xpose.msra.mxu0 0.0
    %501 = vmatpush.xpose.msra.mxu0 0.0
    %502 = vmatpush.xpose.msra.mxu0 0.0
    %503 = vmatpush.xpose.msra.mxu0 0.0
    %504 = vmatpush.xpose.msra.mxu0 0.0
    %505 = vmatpush.xpose.msra.mxu0 0.0
    %506 = vmatpush.xpose.msra.mxu0 %v435
    %507 = vmatmul.f32.gmra.mxu0 %v390
    %v508 = vpop.f32.mrf.mxu0
    %v509 = vadd.f32 0.0, %v508
    %510 = vdwg.mxu0
    %511 = vmatpush.xpose.msra.mxu0 0.0
    %512 = vmatpush.xpose.msra.mxu0 0.0
    %513 = vmatpush.xpose.msra.mxu0 0.0
    %514 = vmatpush.xpose.msra.mxu0 0.0
    %515 = vmatpush.xpose.msra.mxu0 0.0
    %516 = vmatpush.xpose.msra.mxu0 0.0
    %517 = vmatpush.xpose.msra.mxu0 0.0
    %518 = vmatpush.xpose.msra.mxu0 0.0
    %519 = vmatpush.xpose.msra.mxu0 0.0
    %520 = vmatpush.xpose.msra.mxu0 0.0
    %521 = vmatpush.xpose.msra.mxu0 0.0
    %522 = vmatpush.xpose.msra.mxu0 0.0
    %523 = vmatpush.xpose.msra.mxu0 0.0
    %524 = vmatpush.xpose.msra.mxu0 0.0
    %525 = vmatpush.xpose.msra.mxu0 0.0
    %526 = vmatpush.xpose.msra.mxu0 %v438
    %527 = vmatmul.f32.gmra.mxu0 %v393
    %v528 = vpop.f32.mrf.mxu0
    %v529 = vadd.f32 0.0, %v528
    %530 = vdwg.mxu0
    %531 = vmatpush.xpose.msra.mxu0 0.0
    %532 = vmatpush.xpose.msra.mxu0 0.0
    %533 = vmatpush.xpose.msra.mxu0 0.0
    %534 = vmatpush.xpose.msra.mxu0 0.0
    %535 = vmatpush.xpose.msra.mxu0 0.0
    %536 = vmatpush.xpose.msra.mxu0 0.0
    %537 = vmatpush.xpose.msra.mxu0 0.0
    %538 = vmatpush.xpose.msra.mxu0 0.0
    %539 = vmatpush.xpose.msra.mxu0 0.0
    %540 = vmatpush.xpose.msra.mxu0 0.0
    %541 = vmatpush.xpose.msra.mxu0 0.0
    %542 = vmatpush.xpose.msra.mxu0 0.0
    %543 = vmatpush.xpose.msra.mxu0 0.0
    %544 = vmatpush.xpose.msra.mxu0 0.0
    %545 = vmatpush.xpose.msra.mxu0 0.0
    %546 = vmatpush.xpose.msra.mxu0 %v441
    %547 = vmatmul.f32.gmra.mxu0 %v396
    %v548 = vpop.f32.mrf.mxu0
    %v549 = vadd.f32 0.0, %v548
    %550 = vdwg.mxu0
    %551 = vmatpush.xpose.msra.mxu0 0.0
    %552 = vmatpush.xpose.msra.mxu0 0.0
    %553 = vmatpush.xpose.msra.mxu0 0.0
    %554 = vmatpush.xpose.msra.mxu0 0.0
    %555 = vmatpush.xpose.msra.mxu0 0.0
    %556 = vmatpush.xpose.msra.mxu0 0.0
    %557 = vmatpush.xpose.msra.mxu0 0.0
    %558 = vmatpush.xpose.msra.mxu0 0.0
    %559 = vmatpush.xpose.msra.mxu0 0.0
    %560 = vmatpush.xpose.msra.mxu0 0.0
    %561 = vmatpush.xpose.msra.mxu0 0.0
    %562 = vmatpush.xpose.msra.mxu0 0.0
    %563 = vmatpush.xpose.msra.mxu0 0.0
    %564 = vmatpush.xpose.msra.mxu0 0.0
    %565 = vmatpush.xpose.msra.mxu0 0.0
    %566 = vmatpush.xpose.msra.mxu0 %v444
    %567 = vmatmul.f32.gmra.mxu0 %v399
    %v568 = vpop.f32.mrf.mxu0
    %v569 = vadd.f32 0.0, %v568
    %570 = vdwg.mxu0
    %v571 = vmul.f32 %v509, 0.17677669
    %v572 = vmul.f32 %v529, 0.17677669
    %v573 = vmul.f32 %v549, 0.17677669
    %v574 = vmul.f32 %v569, 0.17677669
    %v575 = vld [vmem:[%s1] sm:$0x1]
    %v576 = vld [vmem:[%s1 + $0x1] sm:$0x1]
    %v577 = vld [vmem:[%s1 + $0x2] sm:$0x1]
    %v578 = vld [vmem:[%s1 + $0x3] sm:$0x1]
    %v579 = vsub.f32 %v575, 1.0
    %v580 = vsub.f32 %v576, 1.0
    %v581 = vsub.f32 %v577, 1.0
    %v582 = vsub.f32 %v578, 1.0
    %v583 = vmul.f32 %v579, 1e+09
    %v584 = vmul.f32 %v580, 1e+09
    %v585 = vmul.f32 %v581, 1e+09
    %v586 = vmul.f32 %v582, 1e+09
    %v591 = vperm.slane %v583, 0
    %v592 = vperm.slane %v584, 0
    %v593 = vperm.slane %v585, 0
    %v594 = vperm.slane %v586, 0
    %v599 = vadd.f32 %v571, %v591
    %v600 = vadd.f32 %v572, %v592
    %v601 = vadd.f32 %v573, %v593
    %v602 = vadd.f32 %v574, %v594
    %vm603 = vcmask 64512
    %v604 = vsel %vm603, %v599, -inf
    %605 = vmax.xlane.f32.xlu0 %v604
    %v606 = vpop.xlane.xlu0 %605
    %v607 = vsel %vm603, %v600, -inf
    %608 = vmax.xlane.f32.xlu0 %v607
    %v609 = vpop.xlane.xlu0 %608
    %v610 = vsel %vm603, %v601, -inf
    %611 = vmax.xlane.f32.xlu0 %v610
    %v612 = vpop.xlane.xlu0 %611
    %v613 = vsel %vm603, %v602, -inf
    %614 = vmax.xlane.f32.xlu0 %v613
    %v615 = vpop.xlane.xlu0 %614
    %v616 = vsub.f32 %v599, %v606
    %v617 = vsub.f32 %v600, %v609
    %v618 = vsub.f32 %v601, %v612
    %v619 = vsub.f32 %v602, %v615
    %v620 = vmul.f32 %v616, 1.442695
    %v621 = vpow.pop %v620
    %v622 = vmul.f32 %v617, 1.442695
    %v623 = vpow.pop %v622
    %v624 = vmul.f32 %v618, 1.442695
    %v625 = vpow.pop %v624
    %v626 = vmul.f32 %v619, 1.442695
    %v627 = vpow.pop %v626
    %v628 = vsel %vm603, %v621, 0.0
    %629 = vadd.xlane.f32.xlu0 %v628
    %v630 = vpop.xlane.xlu0 %629
    %v631 = vsel %vm603, %v623, 0.0
    %632 = vadd.xlane.f32.xlu0 %v631
    %v633 = vpop.xlane.xlu0 %632
    %v634 = vsel %vm603, %v625, 0.0
    %635 = vadd.xlane.f32.xlu0 %v634
    %v636 = vpop.xlane.xlu0 %635
    %v637 = vsel %vm603, %v627, 0.0
    %638 = vadd.xlane.f32.xlu0 %v637
    %v639 = vpop.xlane.xlu0 %638
    %v640 = vrcp.pop %v630
    %v641 = vrcp.pop %v633
    %v642 = vrcp.pop %v636
    %v643 = vrcp.pop %v639
    %v644 = vmul.f32 %v621, %v640
    %v645 = vmul.f32 %v623, %v641
    %v646 = vmul.f32 %v625, %v642
    %v647 = vmul.f32 %v627, %v643
    %v649 = vsel %vm603, %v644, 0
    %651 = vmatpush.msra.mxu0 0.0
    %652 = vmatpush.msra.mxu0 0.0
    %653 = vmatpush.msra.mxu0 0.0
    %654 = vmatpush.msra.mxu0 0.0
    %655 = vmatpush.msra.mxu0 0.0
    %656 = vmatpush.msra.mxu0 0.0
    %657 = vmatpush.msra.mxu0 0.0
    %658 = vmatpush.msra.mxu0 0.0
    %659 = vmatpush.msra.mxu0 0.0
    %660 = vmatpush.msra.mxu0 0.0
    %661 = vmatpush.msra.mxu0 0.0
    %662 = vmatpush.msra.mxu0 0.0
    %663 = vmatpush.msra.mxu0 0.0
    %664 = vmatpush.msra.mxu0 0.0
    %665 = vmatpush.msra.mxu0 0.0
    %666 = vmatpush.msra.mxu0 %v480
    %667 = vmatmul.f32.gmra.mxu0 %v649
    %v668 = vpop.f32.mrf.mxu0
    %v669 = vadd.f32 0.0, %v668
    %670 = vdwg.mxu0
    %v672 = vsel %vm603, %v645, 0
    %674 = vmatpush.msra.mxu0 0.0
    %675 = vmatpush.msra.mxu0 0.0
    %676 = vmatpush.msra.mxu0 0.0
    %677 = vmatpush.msra.mxu0 0.0
    %678 = vmatpush.msra.mxu0 0.0
    %679 = vmatpush.msra.mxu0 0.0
    %680 = vmatpush.msra.mxu0 0.0
    %681 = vmatpush.msra.mxu0 0.0
    %682 = vmatpush.msra.mxu0 0.0
    %683 = vmatpush.msra.mxu0 0.0
    %684 = vmatpush.msra.mxu0 0.0
    %685 = vmatpush.msra.mxu0 0.0
    %686 = vmatpush.msra.mxu0 0.0
    %687 = vmatpush.msra.mxu0 0.0
    %688 = vmatpush.msra.mxu0 0.0
    %689 = vmatpush.msra.mxu0 %v483
    %690 = vmatmul.f32.gmra.mxu0 %v672
    %v691 = vpop.f32.mrf.mxu0
    %v692 = vadd.f32 0.0, %v691
    %693 = vdwg.mxu0
    %v695 = vsel %vm603, %v646, 0
    %697 = vmatpush.msra.mxu0 0.0
    %698 = vmatpush.msra.mxu0 0.0
    %699 = vmatpush.msra.mxu0 0.0
    %700 = vmatpush.msra.mxu0 0.0
    %701 = vmatpush.msra.mxu0 0.0
    %702 = vmatpush.msra.mxu0 0.0
    %703 = vmatpush.msra.mxu0 0.0
    %704 = vmatpush.msra.mxu0 0.0
    %705 = vmatpush.msra.mxu0 0.0
    %706 = vmatpush.msra.mxu0 0.0
    %707 = vmatpush.msra.mxu0 0.0
    %708 = vmatpush.msra.mxu0 0.0
    %709 = vmatpush.msra.mxu0 0.0
    %710 = vmatpush.msra.mxu0 0.0
    %711 = vmatpush.msra.mxu0 0.0
    %712 = vmatpush.msra.mxu0 %v486
    %713 = vmatmul.f32.gmra.mxu0 %v695
    %v714 = vpop.f32.mrf.mxu0
    %v715 = vadd.f32 0.0, %v714
    %716 = vdwg.mxu0
    %v718 = vsel %vm603, %v647, 0
    %720 = vmatpush.msra.mxu0 0.0
    %721 = vmatpush.msra.mxu0 0.0
    %722 = vmatpush.msra.mxu0 0.0
    %723 = vmatpush.msra.mxu0 0.0
    %724 = vmatpush.msra.mxu0 0.0
    %725 = vmatpush.msra.mxu0 0.0
    %726 = vmatpush.msra.mxu0 0.0
    %727 = vmatpush.msra.mxu0 0.0
    %728 = vmatpush.msra.mxu0 0.0
    %729 = vmatpush.msra.mxu0 0.0
    %730 = vmatpush.msra.mxu0 0.0
    %731 = vmatpush.msra.mxu0 0.0
    %732 = vmatpush.msra.mxu0 0.0
    %733 = vmatpush.msra.mxu0 0.0
    %734 = vmatpush.msra.mxu0 0.0
    %735 = vmatpush.msra.mxu0 %v489
    %736 = vmatmul.f32.gmra.mxu0 %v718
    %v737 = vpop.f32.mrf.mxu0
    %v738 = vadd.f32 0.0, %v737
    %739 = vdwg.mxu0
    %v740 = vld [vmem:[#allocation10] sm:$0xff]
    %v741 = vld [vmem:[#allocation10 + $0x8] sm:$0xff]
    %v742 = vld [vmem:[#allocation10 + $0x10] sm:$0xff]
    %v743 = vld [vmem:[#allocation10 + $0x18] sm:$0xff]
    %v744 = vld [vmem:[#allocation10 + $0x20] sm:$0xff]
    %v745 = vld [vmem:[#allocation10 + $0x28] sm:$0xff]
    %v746 = vld [vmem:[#allocation10 + $0x30] sm:$0xff]
    %v747 = vld [vmem:[#allocation10 + $0x38] sm:$0xff]
    %v748 = vld [vmem:[#allocation10 + $0x40] sm:$0xff]
    %v749 = vld [vmem:[#allocation10 + $0x48] sm:$0xff]
    %v750 = vld [vmem:[#allocation10 + $0x50] sm:$0xff]
    %v751 = vld [vmem:[#allocation10 + $0x58] sm:$0xff]
    %v752 = vld [vmem:[#allocation10 + $0x60] sm:$0xff]
    %v753 = vld [vmem:[#allocation10 + $0x68] sm:$0xff]
    %v754 = vld [vmem:[#allocation10 + $0x70] sm:$0xff]
    %v755 = vld [vmem:[#allocation10 + $0x78] sm:$0xff]
    %756 = vmatpush.msra.mxu0 %v755
    %757 = vmatpush.msra.mxu0 %v754
    %758 = vmatpush.msra.mxu0 %v753
    %759 = vmatpush.msra.mxu0 %v752
    %760 = vmatpush.msra.mxu0 %v751
    %761 = vmatpush.msra.mxu0 %v750
    %762 = vmatpush.msra.mxu0 %v749
    %763 = vmatpush.msra.mxu0 %v748
    %764 = vmatpush.msra.mxu0 %v747
    %765 = vmatpush.msra.mxu0 %v746
    %766 = vmatpush.msra.mxu0 %v745
    %767 = vmatpush.msra.mxu0 %v744
    %768 = vmatpush.msra.mxu0 %v743
    %769 = vmatpush.msra.mxu0 %v742
    %770 = vmatpush.msra.mxu0 %v741
    %771 = vmatpush.msra.mxu0 %v740
    %772 = vmatmul.f32.gmra.mxu0 %v669
    %v773 = vpop.f32.mrf.mxu0
    %v774 = vadd.f32 0.0, %v773
    %775 = vmatmul.f32.gmra.mxu0 %v692
    %v776 = vpop.f32.mrf.mxu0
    %v777 = vadd.f32 0.0, %v776
    %778 = vmatmul.f32.gmra.mxu0 %v715
    %v779 = vpop.f32.mrf.mxu0
    %v780 = vadd.f32 0.0, %v779
    %781 = vmatmul.f32.gmra.mxu0 %v738
    %v782 = vpop.f32.mrf.mxu0
    %v783 = vadd.f32 0.0, %v782
    %784 = vdwg.mxu0
    %v785 = vadd.f32 %v352, %v774
    %v786 = vadd.f32 %v353, %v777
    %v787 = vadd.f32 %v354, %v780
    %v788 = vadd.f32 %v355, %v783
    %v789 = vld [vmem:[%s10] sm:$0x1]
    %v790 = vld [vmem:[%s11] sm:$0x1]
    %791 = vadd.xlane.f32.xlu0 %v785
    %v792 = vpop.xlane.xlu0 %791
    %793 = vadd.xlane.f32.xlu0 %v786
    %v794 = vpop.xlane.xlu0 %793
    %795 = vadd.xlane.f32.xlu0 %v787
    %v796 = vpop.xlane.xlu0 %795
    %797 = vadd.xlane.f32.xlu0 %v788
    %v798 = vpop.xlane.xlu0 %797
    %v799 = vmul.f32 %v792, 0.03125
    %v800 = vmul.f32 %v794, 0.03125
    %v801 = vmul.f32 %v796, 0.03125
    %v802 = vmul.f32 %v798, 0.03125
    %v803 = vmul.f32 %v785, %v785
    %v804 = vmul.f32 %v786, %v786
    %v805 = vmul.f32 %v787, %v787
    %v806 = vmul.f32 %v788, %v788
    %807 = vadd.xlane.f32.xlu0 %v803
    %v808 = vpop.xlane.xlu0 %807
    %809 = vadd.xlane.f32.xlu0 %v804
    %v810 = vpop.xlane.xlu0 %809
    %811 = vadd.xlane.f32.xlu0 %v805
    %v812 = vpop.xlane.xlu0 %811
    %813 = vadd.xlane.f32.xlu0 %v806
    %v814 = vpop.xlane.xlu0 %813
    %v815 = vmul.f32 %v808, 0.03125
    %v816 = vmul.f32 %v810, 0.03125
    %v817 = vmul.f32 %v812, 0.03125
    %v818 = vmul.f32 %v814, 0.03125
    %v819 = vmul.f32 %v799, %v799
    %v820 = vmul.f32 %v800, %v800
    %v821 = vmul.f32 %v801, %v801
    %v822 = vmul.f32 %v802, %v802
    %v823 = vsub.f32 %v815, %v819
    %v824 = vsub.f32 %v816, %v820
    %v825 = vsub.f32 %v817, %v821
    %v826 = vsub.f32 %v818, %v822
    %v827 = vmax.f32 %v823, 0.0
    %v828 = vmax.f32 %v824, 0.0
    %v829 = vmax.f32 %v825, 0.0
    %v830 = vmax.f32 %v826, 0.0
    %v831 = vsub.f32 %v785, %v799
    %v832 = vsub.f32 %v786, %v800
    %v833 = vsub.f32 %v787, %v801
    %v834 = vsub.f32 %v788, %v802
    %v835 = vadd.f32 %v827, 1e-12
    %v836 = vadd.f32 %v828, 1e-12
    %v837 = vadd.f32 %v829, 1e-12
    %v838 = vadd.f32 %v830, 1e-12
    %v839 = vrsqrt.pop %v835
    %v840 = vmul.f32 %v839, %v835
    %v841 = vmul.f32 %v840, %v839
    %v842 = vmul.f32 0.5, %v841
    %v843 = vsub.f32 1.5, %v842
    %v844 = vmul.f32 %v839, %v843
    %vm845 = vweird.f32 %v835
    %vm846 = vweird.f32 %v839
    %vm847 = vmor %vm845, %vm846
    %v848 = vsel %vm847, %v839, %v844
    %v849 = vrsqrt.pop %v836
    %v850 = vmul.f32 %v849, %v836
    %v851 = vmul.f32 %v850, %v849
    %v852 = vmul.f32 0.5, %v851
    %v853 = vsub.f32 1.5, %v852
    %v854 = vmul.f32 %v849, %v853
    %vm855 = vweird.f32 %v836
    %vm856 = vweird.f32 %v849
    %vm857 = vmor %vm855, %vm856
    %v858 = vsel %vm857, %v849, %v854
    %v859 = vrsqrt.pop %v837
    %v860 = vmul.f32 %v859, %v837
    %v861 = vmul.f32 %v860, %v859
    %v862 = vmul.f32 0.5, %v861
    %v863 = vsub.f32 1.5, %v862
    %v864 = vmul.f32 %v859, %v863
    %vm865 = vweird.f32 %v837
    %vm866 = vweird.f32 %v859
    %vm867 = vmor %vm865, %vm866
    %v868 = vsel %vm867, %v859, %v864
    %v869 = vrsqrt.pop %v838
    %v870 = vmul.f32 %v869, %v838
    %v871 = vmul.f32 %v870, %v869
    %v872 = vmul.f32 0.5, %v871
    %v873 = vsub.f32 1.5, %v872
    %v874 = vmul.f32 %v869, %v873
    %vm875 = vweird.f32 %v838
    %vm876 = vweird.f32 %v869
    %vm877 = vmor %vm875, %vm876
    %v878 = vsel %vm877, %v869, %v874
    %v879 = vmul.f32 %v831, %v848
    %v880 = vmul.f32 %v832, %v858
    %v881 = vmul.f32 %v833, %v868
    %v882 = vmul.f32 %v834, %v878
    %v884 = vperm.slane %v789, 0
    %v886 = vmul.f32 %v879, %v884
    %v887 = vmul.f32 %v880, %v884
    %v888 = vmul.f32 %v881, %v884
    %v889 = vmul.f32 %v882, %v884
    %v891 = vperm.slane %v790, 0
    %v893 = vadd.f32 %v886, %v891
    %v894 = vadd.f32 %v887, %v891
    %v895 = vadd.f32 %v888, %v891
    %v896 = vadd.f32 %v889, %v891
    %v897 = vld [vmem:[#allocation11] sm:$0xff]
    %v898 = vld [vmem:[#allocation11 + $0x8] sm:$0xff]
    %v899 = vld [vmem:[#allocation11 + $0x10] sm:$0xff]
    %v900 = vld [vmem:[#allocation11 + $0x18] sm:$0xff]
    %v901 = vld [vmem:[#allocation11 + $0x20] sm:$0xff]
    %v902 = vld [vmem:[#allocation11 + $0x28] sm:$0xff]
    %v903 = vld [vmem:[#allocation11 + $0x30] sm:$0xff]
    %v904 = vld [vmem:[#allocation11 + $0x38] sm:$0xff]
    %v905 = vld [vmem:[#allocation11 + $0x40] sm:$0xff]
    %v906 = vld [vmem:[#allocation11 + $0x48] sm:$0xff]
    %v907 = vld [vmem:[#allocation11 + $0x50] sm:$0xff]
    %v908 = vld [vmem:[#allocation11 + $0x58] sm:$0xff]
    %v909 = vld [vmem:[#allocation11 + $0x60] sm:$0xff]
    %v910 = vld [vmem:[#allocation11 + $0x68] sm:$0xff]
    %v911 = vld [vmem:[#allocation11 + $0x70] sm:$0xff]
    %v912 = vld [vmem:[#allocation11 + $0x78] sm:$0xff]
    %913 = vmatpush.msra.mxu0 %v912
    %914 = vmatpush.msra.mxu0 %v911
    %915 = vmatpush.msra.mxu0 %v910
    %916 = vmatpush.msra.mxu0 %v909
    %917 = vmatpush.msra.mxu0 %v908
    %918 = vmatpush.msra.mxu0 %v907
    %919 = vmatpush.msra.mxu0 %v906
    %920 = vmatpush.msra.mxu0 %v905
    %921 = vmatpush.msra.mxu0 %v904
    %922 = vmatpush.msra.mxu0 %v903
    %923 = vmatpush.msra.mxu0 %v902
    %924 = vmatpush.msra.mxu0 %v901
    %925 = vmatpush.msra.mxu0 %v900
    %926 = vmatpush.msra.mxu0 %v899
    %927 = vmatpush.msra.mxu0 %v898
    %928 = vmatpush.msra.mxu0 %v897
    %929 = vmatmul.f32.gmra.mxu0 %v893
    %v930 = vpop.f32.mrf.mxu0
    %v931 = vadd.f32 0.0, %v930
    %932 = vmatmul.f32.gmra.mxu0 %v894
    %v933 = vpop.f32.mrf.mxu0
    %v934 = vadd.f32 0.0, %v933
    %935 = vmatmul.f32.gmra.mxu0 %v895
    %v936 = vpop.f32.mrf.mxu0
    %v937 = vadd.f32 0.0, %v936
    %938 = vmatmul.f32.gmra.mxu0 %v896
    %v939 = vpop.f32.mrf.mxu0
    %v940 = vadd.f32 0.0, %v939
    %941 = vdwg.mxu0
    %v942 = vmul.f32 %v931, %v931
    %v943 = vmul.f32 %v934, %v934
    %v944 = vmul.f32 %v937, %v937
    %v945 = vmul.f32 %v940, %v940
    %v946 = vmul.f32 %v931, %v942
    %v947 = vmul.f32 %v934, %v943
    %v948 = vmul.f32 %v937, %v944
    %v949 = vmul.f32 %v940, %v945
    %v950 = vmul.f32 %v946, 0.044715
    %v951 = vmul.f32 %v947, 0.044715
    %v952 = vmul.f32 %v948, 0.044715
    %v953 = vmul.f32 %v949, 0.044715
    %v954 = vadd.f32 %v931, %v950
    %v955 = vadd.f32 %v934, %v951
    %v956 = vadd.f32 %v937, %v952
    %v957 = vadd.f32 %v940, %v953
    %v958 = vmul.f32 %v954, 0.7978846
    %v959 = vmul.f32 %v955, 0.7978846
    %v960 = vmul.f32 %v956, 0.7978846
    %v961 = vmul.f32 %v957, 0.7978846
    %v962 = vtanh.pop %v958
    %v963 = vtanh.pop %v959
    %v964 = vtanh.pop %v960
    %v965 = vtanh.pop %v961
    %v966 = vadd.f32 %v962, 1.0
    %v967 = vadd.f32 %v963, 1.0
    %v968 = vadd.f32 %v964, 1.0
    %v969 = vadd.f32 %v965, 1.0
    %v970 = vmul.f32 %v966, 0.5
    %v971 = vmul.f32 %v967, 0.5
    %v972 = vmul.f32 %v968, 0.5
    %v973 = vmul.f32 %v969, 0.5
    %v974 = vmul.f32 %v931, %v970
    %v975 = vmul.f32 %v934, %v971
    %v976 = vmul.f32 %v937, %v972
    %v977 = vmul.f32 %v940, %v973
    %v978 = vld [vmem:[#allocation13] sm:$0xff]
    %v979 = vld [vmem:[#allocation13 + $0x8] sm:$0xff]
    %v980 = vld [vmem:[#allocation13 + $0x10] sm:$0xff]
    %v981 = vld [vmem:[#allocation13 + $0x18] sm:$0xff]
    %v982 = vld [vmem:[#allocation13 + $0x20] sm:$0xff]
    %v983 = vld [vmem:[#allocation13 + $0x28] sm:$0xff]
    %v984 = vld [vmem:[#allocation13 + $0x30] sm:$0xff]
    %v985 = vld [vmem:[#allocation13 + $0x38] sm:$0xff]
    %v986 = vld [vmem:[#allocation13 + $0x40] sm:$0xff]
    %v987 = vld [vmem:[#allocation13 + $0x48] sm:$0xff]
    %v988 = vld [vmem:[#allocation13 + $0x50] sm:$0xff]
    %v989 = vld [vmem:[#allocation13 + $0x58] sm:$0xff]
    %v990 = vld [vmem:[#allocation13 + $0x60] sm:$0xff]
    %v991 = vld [vmem:[#allocation13 + $0x68] sm:$0xff]
    %v992 = vld [vmem:[#allocation13 + $0x70] sm:$0xff]
    %v993 = vld [vmem:[#allocation13 + $0x78] sm:$0xff]
    %994 = vmatpush.msra.mxu0 %v993
    %995 = vmatpush.msra.mxu0 %v992
    %996 = vmatpush.msra.mxu0 %v991
    %997 = vmatpush.msra.mxu0 %v990
    %998 = vmatpush.msra.mxu0 %v989
    %999 = vmatpush.msra.mxu0 %v988
    %1000 = vmatpush.msra.mxu0 %v987
    %1001 = vmatpush.msra.mxu0 %v986
    %1002 = vmatpush.msra.mxu0 %v985
    %1003 = vmatpush.msra.mxu0 %v984
    %1004 = vmatpush.msra.mxu0 %v983
    %1005 = vmatpush.msra.mxu0 %v982
    %1006 = vmatpush.msra.mxu0 %v981
    %1007 = vmatpush.msra.mxu0 %v980
    %1008 = vmatpush.msra.mxu0 %v979
    %1009 = vmatpush.msra.mxu0 %v978
    %1010 = vmatmul.f32.gmra.mxu0 %v974
    %v1011 = vpop.f32.mrf.mxu0
    %v1012 = vadd.f32 0.0, %v1011
    %1013 = vmatmul.f32.gmra.mxu0 %v975
    %v1014 = vpop.f32.mrf.mxu0
    %v1015 = vadd.f32 0.0, %v1014
    %1016 = vmatmul.f32.gmra.mxu0 %v976
    %v1017 = vpop.f32.mrf.mxu0
    %v1018 = vadd.f32 0.0, %v1017
    %1019 = vmatmul.f32.gmra.mxu0 %v977
    %v1020 = vpop.f32.mrf.mxu0
    %v1021 = vadd.f32 0.0, %v1020
    %1022 = vdwg.mxu0
    %v1023 = vadd.f32 %v893, %v1012
    %v1024 = vadd.f32 %v894, %v1015
    %v1025 = vadd.f32 %v895, %v1018
    %v1026 = vadd.f32 %v896, %v1021
    %v1027 = vld [vmem:[%s14] sm:$0x1]
    %v1028 = vld [vmem:[%s15] sm:$0x1]
    %1029 = vadd.xlane.f32.xlu0 %v1023
    %v1030 = vpop.xlane.xlu0 %1029
    %1031 = vadd.xlane.f32.xlu0 %v1024
    %v1032 = vpop.xlane.xlu0 %1031
    %1033 = vadd.xlane.f32.xlu0 %v1025
    %v1034 = vpop.xlane.xlu0 %1033
    %1035 = vadd.xlane.f32.xlu0 %v1026
    %v1036 = vpop.xlane.xlu0 %1035
    %v1037 = vmul.f32 %v1030, 0.03125
    %v1038 = vmul.f32 %v1032, 0.03125
    %v1039 = vmul.f32 %v1034, 0.03125
    %v1040 = vmul.f32 %v1036, 0.03125
    %v1041 = vmul.f32 %v1023, %v1023
    %v1042 = vmul.f32 %v1024, %v1024
    %v1043 = vmul.f32 %v1025, %v1025
    %v1044 = vmul.f32 %v1026, %v1026
    %1045 = vadd.xlane.f32.xlu0 %v1041
    %v1046 = vpop.xlane.xlu0 %1045
    %1047 = vadd.xlane.f32.xlu0 %v1042
    %v1048 = vpop.xlane.xlu0 %1047
    %1049 = vadd.xlane.f32.xlu0 %v1043
    %v1050 = vpop.xlane.xlu0 %1049
    %1051 = vadd.xlane.f32.xlu0 %v1044
    %v1052 = vpop.xlane.xlu0 %1051
    %v1053 = vmul.f32 %v1046, 0.03125
    %v1054 = vmul.f32 %v1048, 0.03125
    %v1055 = vmul.f32 %v1050, 0.03125
    %v1056 = vmul.f32 %v1052, 0.03125
    %v1057 = vmul.f32 %v1037, %v1037
    %v1058 = vmul.f32 %v1038, %v1038
    %v1059 = vmul.f32 %v1039, %v1039
    %v1060 = vmul.f32 %v1040, %v1040
    %v1061 = vsub.f32 %v1053, %v1057
    %v1062 = vsub.f32 %v1054, %v1058
    %v1063 = vsub.f32 %v1055, %v1059
    %v1064 = vsub.f32 %v1056, %v1060
    %v1065 = vmax.f32 %v1061, 0.0
    %v1066 = vmax.f32 %v1062, 0.0
    %v1067 = vmax.f32 %v1063, 0.0
    %v1068 = vmax.f32 %v1064, 0.0
    %v1069 = vsub.f32 %v1023, %v1037
    %v1070 = vsub.f32 %v1024, %v1038
    %v1071 = vsub.f32 %v1025, %v1039
    %v1072 = vsub.f32 %v1026, %v1040
    %v1073 = vadd.f32 %v1065, 1e-12
    %v1074 = vadd.f32 %v1066, 1e-12
    %v1075 = vadd.f32 %v1067, 1e-12
    %v1076 = vadd.f32 %v1068, 1e-12
    %v1077 = vrsqrt.pop %v1073
    %v1078 = vmul.f32 %v1077, %v1073
    %v1079 = vmul.f32 %v1078, %v1077
    %v1080 = vmul.f32 0.5, %v1079
    %v1081 = vsub.f32 1.5, %v1080
    %v1082 = vmul.f32 %v1077, %v1081
    %vm1083 = vweird.f32 %v1073
    %vm1084 = vweird.f32 %v1077
    %vm1085 = vmor %vm1083, %vm1084
    %v1086 = vsel %vm1085, %v1077, %v1082
    %v1087 = vrsqrt.pop %v1074
    %v1088 = vmul.f32 %v1087, %v1074
    %v1089 = vmul.f32 %v1088, %v1087
    %v1090 = vmul.f32 0.5, %v1089
    %v1091 = vsub.f32 1.5, %v1090
    %v1092 = vmul.f32 %v1087, %v1091
    %vm1093 = vweird.f32 %v1074
    %vm1094 = vweird.f32 %v1087
    %vm1095 = vmor %vm1093, %vm1094
    %v1096 = vsel %vm1095, %v1087, %v1092
    %v1097 = vrsqrt.pop %v1075
    %v1098 = vmul.f32 %v1097, %v1075
    %v1099 = vmul.f32 %v1098, %v1097
    %v1100 = vmul.f32 0.5, %v1099
    %v1101 = vsub.f32 1.5, %v1100
    %v1102 = vmul.f32 %v1097, %v1101
    %vm1103 = vweird.f32 %v1075
    %vm1104 = vweird.f32 %v1097
    %vm1105 = vmor %vm1103, %vm1104
    %v1106 = vsel %vm1105, %v1097, %v1102
    %v1107 = vrsqrt.pop %v1076
    %v1108 = vmul.f32 %v1107, %v1076
    %v1109 = vmul.f32 %v1108, %v1107
    %v1110 = vmul.f32 0.5, %v1109
    %v1111 = vsub.f32 1.5, %v1110
    %v1112 = vmul.f32 %v1107, %v1111
    %vm1113 = vweird.f32 %v1076
    %vm1114 = vweird.f32 %v1107
    %vm1115 = vmor %vm1113, %vm1114
    %v1116 = vsel %vm1115, %v1107, %v1112
    %v1117 = vmul.f32 %v1069, %v1086
    %v1118 = vmul.f32 %v1070, %v1096
    %v1119 = vmul.f32 %v1071, %v1106
    %v1120 = vmul.f32 %v1072, %v1116
    %v1122 = vperm.slane %v1027, 0
    %v1124 = vmul.f32 %v1117, %v1122
    %v1125 = vmul.f32 %v1118, %v1122
    %v1126 = vmul.f32 %v1119, %v1122
    %v1127 = vmul.f32 %v1120, %v1122
    %v1129 = vperm.slane %v1028, 0
    %v1131 = vadd.f32 %v1124, %v1129
    %v1132 = vadd.f32 %v1125, %v1129
    %v1133 = vadd.f32 %v1126, %v1129
    %v1134 = vadd.f32 %v1127, %v1129
    %v1135 = vrot.slane %v1131, 4
    %v1136 = vadd.f32 %v1131, %v1135
    %v1137 = vrot.slane %v1136, 2
    %v1138 = vadd.f32 %v1136, %v1137
    %v1139 = vrot.slane %v1138, 1
    %v1140 = vadd.f32 %v1138, %v1139
    %v1141 = vrot.slane %v1132, 4
    %v1142 = vadd.f32 %v1132, %v1141
    %v1143 = vrot.slane %v1142, 2
    %v1144 = vadd.f32 %v1142, %v1143
    %v1145 = vrot.slane %v1144, 1
    %v1146 = vadd.f32 %v1144, %v1145
    %v1147 = vrot.slane %v1133, 4
    %v1148 = vadd.f32 %v1133, %v1147
    %v1149 = vrot.slane %v1148, 2
    %v1150 = vadd.f32 %v1148, %v1149
    %v1151 = vrot.slane %v1150, 1
    %v1152 = vadd.f32 %v1150, %v1151
    %v1153 = vrot.slane %v1134, 4
    %v1154 = vadd.f32 %v1134, %v1153
    %v1155 = vrot.slane %v1154, 2
    %v1156 = vadd.f32 %v1154, %v1155
    %v1157 = vrot.slane %v1156, 1
    %v1158 = vadd.f32 %v1156, %v1157
    %v1159 = vrcp.pop 8.0
    %v1160 = vmul.f32 8.0, %v1159
    %v1161 = vsub.f32 1.0, %v1160
    %v1162 = vmul.f32 %v1159, %v1161
    %v1163 = vadd.f32 %v1159, %v1162
    %vm1164 = vweird.f32 %v1159
    %v1165 = vsel %vm1164, %v1159, %v1163
    %v1166 = vmul.f32 %v1140, %v1165
    %v1167 = vmul.f32 %v1146, %v1165
    %v1168 = vmul.f32 %v1152, %v1165
    %v1169 = vmul.f32 %v1158, %v1165
    %v1170 = vmul.f32 %v1166, %v1168
    %v1171 = vmul.f32 %v1167, %v1169
    %vm1174 = vcmask 1041409
    %v1175 = vsel %vm1174, %v1171, %v1170
    %vm1177 = vcmask 1041408
    %v1178 = vsel %vm1177, %v1175, 0.0
    %1179 = vadd.xlane.f32.xlu0 %v1178
    %v1180 = vpop.xlane.xlu0 %1179
    %v1181 = vsel %vm1177, %v1180, 0.0
    %1183 = vset.pattern.permute.xlu0 0
    %1184 = vperm.xlu0 %1183, %v1181
    %v1185 = vpop.permute.xlu0 %1184
    %1187 = vst [vmem:[#allocation14] sm:$0xff] %v1185
    // Predicated region
    $region94: #{tpu_custom_call.1} parent=1 // pred_check
      _
    $region95: #{tpu_custom_call.1} parent=1 // pred_check_branch
      %1189 = sbr.rel (0) target = $region97
    $region96: #{tpu_custom_call.1} parent=1 // pred_region
      %1191 = vsyncadd [#allocation4], 0
      %s1193 = sshll.u32 [#allocation14], 4
      %s1194 = int_to_ptr.vmem [resolvable:$true] %s1193
      %s1195 = sshll.u32 %s16, 4
      %s1196 = int_to_ptr.hbm [resolvable:$true] %s1195
      %1198 = dma.vmem_to_hbm [thread:$0]  %s1194, 128, %s1196, [#allocation4]
    $region97: #{tpu_custom_call.1} parent=1 // pred_fallthru
      _
    // Predicated region
    $region98: #{tpu_custom_call.1} parent=1 // pred_check
      _
    $region99: #{tpu_custom_call.1} parent=1 // pred_check_branch
      %1200 = sbr.rel (0) target = $region101
    $region100: #{tpu_custom_call.1} parent=1 // pred_region
      %1202 = dma.done [#allocation4], 128
    $region101: #{tpu_custom_call.1} parent=1 // pred_fallthru
      _
    %1203 = vsyncpa [#allocation3], 1
    %1204 = vsyncpa [#allocation6], 1
    %1205 = vsyncpa [#allocation9], 1
    %1206 = vsyncpa [#allocation12], 1
    %1207 = vsyncpa [#allocation4], 1

</llo_original>
